<compile_context>
chip_gen: v5e
topology: v5e:2x2
jax: 0.10.0
libtpu: 0.0.40
codegen_flags: <defaults>
</compile_context>

<pallas_src>
import functools

import jax
import jax.numpy as jnp
from jax import lax
from jax.experimental import pallas as pl
from jax.experimental.pallas import tpu as pltpu


def _pad_axis(x2d, pad, axis):
    """Zero-pad a 2-D value by `pad` on both sides of `axis` (in-register)."""
    if pad == 0:
        return x2d
    if axis == 0:
        z = jnp.zeros((pad, x2d.shape[1]), x2d.dtype)
    else:
        z = jnp.zeros((x2d.shape[0], pad), x2d.dtype)
    return jnp.concatenate([z, x2d, z], axis=axis)


def _tap(xp, k, stride, n_out, axis):
    """Rows/cols k, k+stride, ..., k+(n_out-1)*stride of a padded 2-D value."""
    if axis == 0:
        if stride == 1:
            return lax.slice(xp, (k, 0), (k + n_out, xp.shape[1]))
        # stride > 1 path (not exercised by the stride=1 tests below)
        return lax.slice(xp, (k, 0),
                         (k + (n_out - 1) * stride + 1, xp.shape[1]), (stride, 1))
    if stride == 1:
        return lax.slice(xp, (0, k), (xp.shape[0], k + n_out))
    return lax.slice(xp, (0, k),
                     (xp.shape[0], k + (n_out - 1) * stride + 1), (1, stride))


def _stem_kernel(x_ref, w1_ref, s1_ref, b1_ref, w2_ref, s2_ref, b2_ref, o_ref,
                 *, K, sh, sw, pad, Ho, Wo, Cin, oup1, oup2, pool):
    """One batch element. x_ref: (1, Cin, H, W) NCHW, W in lanes.

    w1_ref: (oup1*Cin*K,) SMEM   vertical conv taps, index (i*Cin+c)*K + k
    s1/b1 : (oup1,)       SMEM   fused BN1 scale/bias
    w2_ref: (C2*K,)       SMEM   grouped horizontal conv taps, index oc*K + k
    s2/b2 : (C2,)         SMEM   fused BN2 scale/bias (original channel order)
    o_ref : (1, C_out, Ho, Wo)   final NCHW output (shuffle/pooling folded in)
    """
    f32 = jnp.float32

    # ---- conv1 (K,1): K*Cin VPU FMAs per output channel ----
    xs = []
    for c in range(Cin):
        xp = _pad_axis(x_ref[0, c].astype(f32), pad, axis=0)      # (H+2p, W)
        xs.append([_tap(xp, k, sh, Ho, axis=0) for k in range(K)])  # (Ho, W) each

    ys = []
    for i in range(oup1):
        acc = None
        for c in range(Cin):
            for k in range(K):
                t = xs[c][k] * w1_ref[(i * Cin + c) * K + k]
                acc = t if acc is None else acc + t
        ys.append(jnp.maximum(acc * s1_ref[i] + b1_ref[i], 0.0))   # BN1 + ReLU

    # ---- conv2 (1,K), groups=oup1 (1 input channel per group): K FMAs/channel ----
    ysh = []
    for i in range(oup1):
        yp = _pad_axis(ys[i], pad, axis=1)                          # (Ho, W+2p)
        ysh.append([_tap(yp, k, sw, Wo, axis=1) for k in range(K)])  # (Ho, Wo) each

    def out_channel(m):               # m = shuffled channel index j*oup1 + i
        i, j = m % oup1, m // oup1
        oc = i * oup2 + j             # original conv2 output channel
        acc = None
        for k in range(K):
            t = ysh[i][k] * w2_ref[oc * K + k]
            acc = t if acc is None else acc + t
        return jnp.maximum(acc * s2_ref[oc] + b2_ref[oc], 0.0)      # BN2 + ReLU

    n_out = (oup1 * oup2) // 2 if pool else oup1 * oup2
    for g in range(n_out):
        if pool:                      # MaxGroupPooling(2) over shuffled channels
            val = jnp.maximum(out_channel(2 * g), out_channel(2 * g + 1))
        else:
            val = out_channel(g)
        o_ref[0, g] = val.astype(o_ref.dtype)


def stem_layer(x, w1, bn1, w2, bn2, *, oups=(4, 4), oup=8, kernel_size=3,
               stride=1, eps=1e-5):
    """StemLayer forward.  x: NCHW.  Returns NCHW.  Fully jit-traceable."""
    oup1, oup2 = oups
    B, Cin, H, W = x.shape
    K = kernel_size
    p = K // 2
    Ho = (H + 2 * p - K) // stride + 1
    Wo = (W + 2 * p - K) // stride + 1
    C2 = oup1 * oup2
    pool = (C2 == 2 * oup)
    C_out = C2 // 2 if pool else C2

    # Fold inference-mode BatchNorm into per-channel scale / bias.
    g1, be1, rm1, rv1 = bn1
    sc1 = g1 * lax.rsqrt(rv1 + eps)
    bi1 = be1 - rm1 * sc1
    g2, be2, rm2, rv2 = bn2
    sc2 = g2 * lax.rsqrt(rv2 + eps)
    bi2 = be2 - rm2 * sc2

    # Flatten weights for SMEM scalar access (1-D to avoid SMEM 2-D padding).
    w1_flat = w1[:, :, :, 0].reshape(-1).astype(jnp.float32)   # (oup1*Cin*K,)
    w2_flat = w2[:, 0, 0, :].reshape(-1).astype(jnp.float32)   # (C2*K,)

    kernel = functools.partial(
        _stem_kernel, K=K, sh=stride, sw=stride, pad=p, Ho=Ho, Wo=Wo,
        Cin=Cin, oup1=oup1, oup2=oup2, pool=pool)

    smem = pl.BlockSpec(memory_space=pltpu.MemorySpace.SMEM)
    return pl.pallas_call(
        kernel,
        out_shape=jax.ShapeDtypeStruct((B, C_out, Ho, Wo), x.dtype),
        grid_spec=pltpu.PrefetchScalarGridSpec(
            num_scalar_prefetch=0,
            grid=(B,),
            in_specs=[
                pl.BlockSpec((1, Cin, H, W), lambda b: (b, 0, 0, 0)),
                smem, smem, smem, smem, smem, smem,
            ],
            out_specs=pl.BlockSpec((1, C_out, Ho, Wo), lambda b: (b, 0, 0, 0)),
        ),
        compiler_params=pltpu.CompilerParams(
            dimension_semantics=("parallel",)),
    )(x, w1_flat, sc1.astype(jnp.float32), bi1.astype(jnp.float32),
      w2_flat, sc2.astype(jnp.float32), bi2.astype(jnp.float32))


def _reference(x, w1, bn1, w2, bn2, *, oups, oup, kernel_size, stride, eps=1e-5):
    """Pure-JAX NCHW reference mirroring the PyTorch StemLayer (BN in eval mode)."""
    oup1, oup2 = oups
    K = kernel_size
    p = K // 2

    def bn(z, params):
        g, b, rm, rv = params
        return ((z - rm[None, :, None, None]) *
                lax.rsqrt(rv[None, :, None, None] + eps) *
                g[None, :, None, None] + b[None, :, None, None])

    y = lax.conv_general_dilated(x, w1, window_strides=(stride, 1),
                                 padding=((p, p), (0, 0)),
                                 dimension_numbers=('NCHW', 'OIHW', 'NCHW'))
    y = jnp.maximum(bn(y, bn1), 0.0)
    z = lax.conv_general_dilated(y, w2, window_strides=(1, stride),
                                 padding=((0, 0), (p, p)),
                                 dimension_numbers=('NCHW', 'OIHW', 'NCHW'),
                                 feature_group_count=oup1)
    z = jnp.maximum(bn(z, bn2), 0.0)
    b_, c, h, w = z.shape
    z = z.reshape(b_, oup1, oup2, h, w).transpose(0, 2, 1, 3, 4).reshape(b_, c, h, w)
    if oup1 * oup2 == 2 * oup:                        # MaxGroupPooling(2)
        z = z.reshape(b_, c // 2, 2, h, w).max(axis=2)
    return z


if __name__ == "__main__":
    def make_params(key, inp, oup1, oup2, K):
        ks = jax.random.split(key, 10)
        w1 = 0.1 * jax.random.normal(ks[0], (oup1, inp, K, 1), jnp.float32)
        w2 = 0.1 * jax.random.normal(ks[1], (oup1 * oup2, 1, 1, K), jnp.float32)
        bn1 = (1.0 + 0.1 * jax.random.normal(ks[2], (oup1,), jnp.float32),
               0.1 * jax.random.normal(ks[3], (oup1,), jnp.float32),
               0.1 * jax.random.normal(ks[4], (oup1,), jnp.float32),
               1.0 + 0.1 * jax.random.uniform(ks[5], (oup1,), jnp.float32))
        c2 = oup1 * oup2
        bn2 = (1.0 + 0.1 * jax.random.normal(ks[6], (c2,), jnp.float32),
               0.1 * jax.random.normal(ks[7], (c2,), jnp.float32),
               0.1 * jax.random.normal(ks[8], (c2,), jnp.float32),
               1.0 + 0.1 * jax.random.uniform(ks[9], (c2,), jnp.float32))
        return w1, bn1, w2, bn2

    key = jax.random.PRNGKey(0)
    kx, kp1, kp2 = jax.random.split(key, 3)

    B, inp, H, W, K, stride = 2, 4, 16, 16, 3, 1
    x = jax.random.normal(kx, (B, inp, H, W), jnp.float32)

    # Config 1: StemLayer(inp=4, oup=8, stride=1, groups=(4,4)) -> pooling active.
    cfg1 = dict(oups=(4, 4), oup=8, kernel_size=K, stride=stride)
    w1a, bn1a, w2a, bn2a = make_params(kp1, inp, 4, 4, K)
    fwd1 = jax.jit(functools.partial(stem_layer, **cfg1))   # wrapper is jit-safe
    out1 = jax.block_until_ready(fwd1(x, w1a, bn1a, w2a, bn2a))
    ref1 = _reference(x, w1a, bn1a, w2a, bn2a, **cfg1)
    assert out1.shape == ref1.shape, (out1.shape, ref1.shape)
    err1 = float(jnp.max(jnp.abs(out1 - ref1)))
    assert err1 < 1e-3, f"config1 max abs err {err1}"

    # Config 2: oup=16 -> MaxGroupPooling branch disabled (identity tail).
    cfg2 = dict(oups=(4, 4), oup=16, kernel_size=K, stride=stride)
    w1b, bn1b, w2b, bn2b = make_params(kp2, inp, 4, 4, K)
    out2 = jax.block_until_ready(stem_layer(x, w1b, bn1b, w2b, bn2b, **cfg2))
    ref2 = _reference(x, w1b, bn1b, w2b, bn2b, **cfg2)
    assert out2.shape == ref2.shape, (out2.shape, ref2.shape)
    err2 = float(jnp.max(jnp.abs(out2 - ref2)))
    assert err2 < 1e-3, f"config2 max abs err {err2}"

    print("KERNEL_OK")
</pallas_src>

<mosaic_0001>
module attributes {stable_mosaic.version = 11 : i64} {
  func.func @_stem_kernel(%arg0: i32, %arg1: memref<1x4x16x16xf32, #tpu.memory_space<vmem>>, %arg2: memref<48xf32, #tpu.memory_space<smem>>, %arg3: memref<4xf32, #tpu.memory_space<smem>>, %arg4: memref<4xf32, #tpu.memory_space<smem>>, %arg5: memref<48xf32, #tpu.memory_space<smem>>, %arg6: memref<16xf32, #tpu.memory_space<smem>>, %arg7: memref<16xf32, #tpu.memory_space<smem>>, %arg8: memref<1x8x16x16xf32, #tpu.memory_space<vmem>>) attributes {dimension_semantics = [#tpu.dimension_semantics<parallel>], iteration_bounds = array<i64: 2>, scalar_prefetch = 0 : i64, scratch_operands = 0 : i64, tpu.core_type = #tpu.core_type<tc>, window_params = [{transform_indices = @transform_0, window_bounds = array<i64: 1, 4, 16, 16>}, {transform_indices = @transform_1, window_bounds = array<i64: 48>}, {transform_indices = @transform_2, window_bounds = array<i64: 4>}, {transform_indices = @transform_3, window_bounds = array<i64: 4>}, {transform_indices = @transform_4, window_bounds = array<i64: 48>}, {transform_indices = @transform_5, window_bounds = array<i64: 16>}, {transform_indices = @transform_6, window_bounds = array<i64: 16>}, {transform_indices = @transform_7, window_bounds = array<i64: 1, 8, 16, 16>}]} {
    %c0 = arith.constant 0 : index
    %c0_0 = arith.constant 0 : index
    %c0_1 = arith.constant 0 : index
    %c0_2 = arith.constant 0 : index
    %0 = vector.load %arg1[%c0, %c0_0, %c0_1, %c0_2] : memref<1x4x16x16xf32, #tpu.memory_space<vmem>>, vector<1x1x16x16xf32>
    %1 = vector.shape_cast %0 : vector<1x1x16x16xf32> to vector<16x16xf32>
    %cst = arith.constant 0.000000e+00 : f32
    %2 = vector.broadcast %cst : f32 to vector<1x16xf32>
    %3 = tpu.concatenate %2, %1, %2 in 0 : vector<1x16xf32>, vector<16x16xf32>, vector<1x16xf32> -> vector<18x16xf32>
    %4 = vector.extract_strided_slice %3 {offsets = [0, 0], sizes = [16, 16], strides = [1, 1]} : vector<18x16xf32> to vector<16x16xf32>
    %5 = vector.extract_strided_slice %3 {offsets = [1, 0], sizes = [16, 16], strides = [1, 1]} : vector<18x16xf32> to vector<16x16xf32>
    %6 = vector.extract_strided_slice %3 {offsets = [2, 0], sizes = [16, 16], strides = [1, 1]} : vector<18x16xf32> to vector<16x16xf32>
    %c0_3 = arith.constant 0 : index
    %c1 = arith.constant 1 : index
    %c0_4 = arith.constant 0 : index
    %c0_5 = arith.constant 0 : index
    %7 = vector.load %arg1[%c0_3, %c1, %c0_4, %c0_5] : memref<1x4x16x16xf32, #tpu.memory_space<vmem>>, vector<1x1x16x16xf32>
    %8 = vector.shape_cast %7 : vector<1x1x16x16xf32> to vector<16x16xf32>
    %cst_6 = arith.constant 0.000000e+00 : f32
    %9 = vector.broadcast %cst_6 : f32 to vector<1x16xf32>
    %10 = tpu.concatenate %9, %8, %9 in 0 : vector<1x16xf32>, vector<16x16xf32>, vector<1x16xf32> -> vector<18x16xf32>
    %11 = vector.extract_strided_slice %10 {offsets = [0, 0], sizes = [16, 16], strides = [1, 1]} : vector<18x16xf32> to vector<16x16xf32>
    %12 = vector.extract_strided_slice %10 {offsets = [1, 0], sizes = [16, 16], strides = [1, 1]} : vector<18x16xf32> to vector<16x16xf32>
    %13 = vector.extract_strided_slice %10 {offsets = [2, 0], sizes = [16, 16], strides = [1, 1]} : vector<18x16xf32> to vector<16x16xf32>
    %c0_7 = arith.constant 0 : index
    %c2 = arith.constant 2 : index
    %c0_8 = arith.constant 0 : index
    %c0_9 = arith.constant 0 : index
    %14 = vector.load %arg1[%c0_7, %c2, %c0_8, %c0_9] : memref<1x4x16x16xf32, #tpu.memory_space<vmem>>, vector<1x1x16x16xf32>
    %15 = vector.shape_cast %14 : vector<1x1x16x16xf32> to vector<16x16xf32>
    %cst_10 = arith.constant 0.000000e+00 : f32
    %16 = vector.broadcast %cst_10 : f32 to vector<1x16xf32>
    %17 = tpu.concatenate %16, %15, %16 in 0 : vector<1x16xf32>, vector<16x16xf32>, vector<1x16xf32> -> vector<18x16xf32>
    %18 = vector.extract_strided_slice %17 {offsets = [0, 0], sizes = [16, 16], strides = [1, 1]} : vector<18x16xf32> to vector<16x16xf32>
    %19 = vector.extract_strided_slice %17 {offsets = [1, 0], sizes = [16, 16], strides = [1, 1]} : vector<18x16xf32> to vector<16x16xf32>
    %20 = vector.extract_strided_slice %17 {offsets = [2, 0], sizes = [16, 16], strides = [1, 1]} : vector<18x16xf32> to vector<16x16xf32>
    %c0_11 = arith.constant 0 : index
    %c3 = arith.constant 3 : index
    %c0_12 = arith.constant 0 : index
    %c0_13 = arith.constant 0 : index
    %21 = vector.load %arg1[%c0_11, %c3, %c0_12, %c0_13] : memref<1x4x16x16xf32, #tpu.memory_space<vmem>>, vector<1x1x16x16xf32>
    %22 = vector.shape_cast %21 : vector<1x1x16x16xf32> to vector<16x16xf32>
    %cst_14 = arith.constant 0.000000e+00 : f32
    %23 = vector.broadcast %cst_14 : f32 to vector<1x16xf32>
    %24 = tpu.concatenate %23, %22, %23 in 0 : vector<1x16xf32>, vector<16x16xf32>, vector<1x16xf32> -> vector<18x16xf32>
    %25 = vector.extract_strided_slice %24 {offsets = [0, 0], sizes = [16, 16], strides = [1, 1]} : vector<18x16xf32> to vector<16x16xf32>
    %26 = vector.extract_strided_slice %24 {offsets = [1, 0], sizes = [16, 16], strides = [1, 1]} : vector<18x16xf32> to vector<16x16xf32>
    %27 = vector.extract_strided_slice %24 {offsets = [2, 0], sizes = [16, 16], strides = [1, 1]} : vector<18x16xf32> to vector<16x16xf32>
    %c0_15 = arith.constant 0 : index
    %28 = memref.load %arg2[%c0_15] : memref<48xf32, #tpu.memory_space<smem>>
    %29 = vector.broadcast %28 : f32 to vector<16x16xf32>
    %30 = arith.mulf %4, %29 : vector<16x16xf32>
    %c1_16 = arith.constant 1 : index
    %31 = memref.load %arg2[%c1_16] : memref<48xf32, #tpu.memory_space<smem>>
    %32 = vector.broadcast %31 : f32 to vector<16x16xf32>
    %33 = arith.mulf %5, %32 : vector<16x16xf32>
    %34 = arith.addf %30, %33 : vector<16x16xf32>
    %c2_17 = arith.constant 2 : index
    %35 = memref.load %arg2[%c2_17] : memref<48xf32, #tpu.memory_space<smem>>
    %36 = vector.broadcast %35 : f32 to vector<16x16xf32>
    %37 = arith.mulf %6, %36 : vector<16x16xf32>
    %38 = arith.addf %34, %37 : vector<16x16xf32>
    %c3_18 = arith.constant 3 : index
    %39 = memref.load %arg2[%c3_18] : memref<48xf32, #tpu.memory_space<smem>>
    %40 = vector.broadcast %39 : f32 to vector<16x16xf32>
    %41 = arith.mulf %11, %40 : vector<16x16xf32>
    %42 = arith.addf %38, %41 : vector<16x16xf32>
    %c4 = arith.constant 4 : index
    %43 = memref.load %arg2[%c4] : memref<48xf32, #tpu.memory_space<smem>>
    %44 = vector.broadcast %43 : f32 to vector<16x16xf32>
    %45 = arith.mulf %12, %44 : vector<16x16xf32>
    %46 = arith.addf %42, %45 : vector<16x16xf32>
    %c5 = arith.constant 5 : index
    %47 = memref.load %arg2[%c5] : memref<48xf32, #tpu.memory_space<smem>>
    %48 = vector.broadcast %47 : f32 to vector<16x16xf32>
    %49 = arith.mulf %13, %48 : vector<16x16xf32>
    %50 = arith.addf %46, %49 : vector<16x16xf32>
    %c6 = arith.constant 6 : index
    %51 = memref.load %arg2[%c6] : memref<48xf32, #tpu.memory_space<smem>>
    %52 = vector.broadcast %51 : f32 to vector<16x16xf32>
    %53 = arith.mulf %18, %52 : vector<16x16xf32>
    %54 = arith.addf %50, %53 : vector<16x16xf32>
    %c7 = arith.constant 7 : index
    %55 = memref.load %arg2[%c7] : memref<48xf32, #tpu.memory_space<smem>>
    %56 = vector.broadcast %55 : f32 to vector<16x16xf32>
    %57 = arith.mulf %19, %56 : vector<16x16xf32>
    %58 = arith.addf %54, %57 : vector<16x16xf32>
    %c8 = arith.constant 8 : index
    %59 = memref.load %arg2[%c8] : memref<48xf32, #tpu.memory_space<smem>>
    %60 = vector.broadcast %59 : f32 to vector<16x16xf32>
    %61 = arith.mulf %20, %60 : vector<16x16xf32>
    %62 = arith.addf %58, %61 : vector<16x16xf32>
    %c9 = arith.constant 9 : index
    %63 = memref.load %arg2[%c9] : memref<48xf32, #tpu.memory_space<smem>>
    %64 = vector.broadcast %63 : f32 to vector<16x16xf32>
    %65 = arith.mulf %25, %64 : vector<16x16xf32>
    %66 = arith.addf %62, %65 : vector<16x16xf32>
    %c10 = arith.constant 10 : index
    %67 = memref.load %arg2[%c10] : memref<48xf32, #tpu.memory_space<smem>>
    %68 = vector.broadcast %67 : f32 to vector<16x16xf32>
    %69 = arith.mulf %26, %68 : vector<16x16xf32>
    %70 = arith.addf %66, %69 : vector<16x16xf32>
    %c11 = arith.constant 11 : index
    %71 = memref.load %arg2[%c11] : memref<48xf32, #tpu.memory_space<smem>>
    %72 = vector.broadcast %71 : f32 to vector<16x16xf32>
    %73 = arith.mulf %27, %72 : vector<16x16xf32>
    %74 = arith.addf %70, %73 : vector<16x16xf32>
    %c0_19 = arith.constant 0 : index
    %75 = memref.load %arg3[%c0_19] : memref<4xf32, #tpu.memory_space<smem>>
    %76 = vector.broadcast %75 : f32 to vector<16x16xf32>
    %77 = arith.mulf %74, %76 : vector<16x16xf32>
    %c0_20 = arith.constant 0 : index
    %78 = memref.load %arg4[%c0_20] : memref<4xf32, #tpu.memory_space<smem>>
    %79 = vector.broadcast %78 : f32 to vector<16x16xf32>
    %80 = arith.addf %77, %79 : vector<16x16xf32>
    %cst_21 = arith.constant 0.000000e+00 : f32
    %81 = vector.broadcast %cst_21 : f32 to vector<16x16xf32>
    %82 = arith.maximumf %80, %81 : vector<16x16xf32>
    %c12 = arith.constant 12 : index
    %83 = memref.load %arg2[%c12] : memref<48xf32, #tpu.memory_space<smem>>
    %84 = vector.broadcast %83 : f32 to vector<16x16xf32>
    %85 = arith.mulf %4, %84 : vector<16x16xf32>
    %c13 = arith.constant 13 : index
    %86 = memref.load %arg2[%c13] : memref<48xf32, #tpu.memory_space<smem>>
    %87 = vector.broadcast %86 : f32 to vector<16x16xf32>
    %88 = arith.mulf %5, %87 : vector<16x16xf32>
    %89 = arith.addf %85, %88 : vector<16x16xf32>
    %c14 = arith.constant 14 : index
    %90 = memref.load %arg2[%c14] : memref<48xf32, #tpu.memory_space<smem>>
    %91 = vector.broadcast %90 : f32 to vector<16x16xf32>
    %92 = arith.mulf %6, %91 : vector<16x16xf32>
    %93 = arith.addf %89, %92 : vector<16x16xf32>
    %c15 = arith.constant 15 : index
    %94 = memref.load %arg2[%c15] : memref<48xf32, #tpu.memory_space<smem>>
    %95 = vector.broadcast %94 : f32 to vector<16x16xf32>
    %96 = arith.mulf %11, %95 : vector<16x16xf32>
    %97 = arith.addf %93, %96 : vector<16x16xf32>
    %c16 = arith.constant 16 : index
    %98 = memref.load %arg2[%c16] : memref<48xf32, #tpu.memory_space<smem>>
    %99 = vector.broadcast %98 : f32 to vector<16x16xf32>
    %100 = arith.mulf %12, %99 : vector<16x16xf32>
    %101 = arith.addf %97, %100 : vector<16x16xf32>
    %c17 = arith.constant 17 : index
    %102 = memref.load %arg2[%c17] : memref<48xf32, #tpu.memory_space<smem>>
    %103 = vector.broadcast %102 : f32 to vector<16x16xf32>
    %104 = arith.mulf %13, %103 : vector<16x16xf32>
    %105 = arith.addf %101, %104 : vector<16x16xf32>
    %c18 = arith.constant 18 : index
    %106 = memref.load %arg2[%c18] : memref<48xf32, #tpu.memory_space<smem>>
    %107 = vector.broadcast %106 : f32 to vector<16x16xf32>
    %108 = arith.mulf %18, %107 : vector<16x16xf32>
    %109 = arith.addf %105, %108 : vector<16x16xf32>
    %c19 = arith.constant 19 : index
    %110 = memref.load %arg2[%c19] : memref<48xf32, #tpu.memory_space<smem>>
    %111 = vector.broadcast %110 : f32 to vector<16x16xf32>
    %112 = arith.mulf %19, %111 : vector<16x16xf32>
    %113 = arith.addf %109, %112 : vector<16x16xf32>
    %c20 = arith.constant 20 : index
    %114 = memref.load %arg2[%c20] : memref<48xf32, #tpu.memory_space<smem>>
    %115 = vector.broadcast %114 : f32 to vector<16x16xf32>
    %116 = arith.mulf %20, %115 : vector<16x16xf32>
    %117 = arith.addf %113, %116 : vector<16x16xf32>
    %c21 = arith.constant 21 : index
    %118 = memref.load %arg2[%c21] : memref<48xf32, #tpu.memory_space<smem>>
    %119 = vector.broadcast %118 : f32 to vector<16x16xf32>
    %120 = arith.mulf %25, %119 : vector<16x16xf32>
    %121 = arith.addf %117, %120 : vector<16x16xf32>
    %c22 = arith.constant 22 : index
    %122 = memref.load %arg2[%c22] : memref<48xf32, #tpu.memory_space<smem>>
    %123 = vector.broadcast %122 : f32 to vector<16x16xf32>
    %124 = arith.mulf %26, %123 : vector<16x16xf32>
    %125 = arith.addf %121, %124 : vector<16x16xf32>
    %c23 = arith.constant 23 : index
    %126 = memref.load %arg2[%c23] : memref<48xf32, #tpu.memory_space<smem>>
    %127 = vector.broadcast %126 : f32 to vector<16x16xf32>
    %128 = arith.mulf %27, %127 : vector<16x16xf32>
    %129 = arith.addf %125, %128 : vector<16x16xf32>
    %c1_22 = arith.constant 1 : index
    %130 = memref.load %arg3[%c1_22] : memref<4xf32, #tpu.memory_space<smem>>
    %131 = vector.broadcast %130 : f32 to vector<16x16xf32>
    %132 = arith.mulf %129, %131 : vector<16x16xf32>
    %c1_23 = arith.constant 1 : index
    %133 = memref.load %arg4[%c1_23] : memref<4xf32, #tpu.memory_space<smem>>
    %134 = vector.broadcast %133 : f32 to vector<16x16xf32>
    %135 = arith.addf %132, %134 : vector<16x16xf32>
    %cst_24 = arith.constant 0.000000e+00 : f32
    %136 = vector.broadcast %cst_24 : f32 to vector<16x16xf32>
    %137 = arith.maximumf %135, %136 : vector<16x16xf32>
    %c24 = arith.constant 24 : index
    %138 = memref.load %arg2[%c24] : memref<48xf32, #tpu.memory_space<smem>>
    %139 = vector.broadcast %138 : f32 to vector<16x16xf32>
    %140 = arith.mulf %4, %139 : vector<16x16xf32>
    %c25 = arith.constant 25 : index
    %141 = memref.load %arg2[%c25] : memref<48xf32, #tpu.memory_space<smem>>
    %142 = vector.broadcast %141 : f32 to vector<16x16xf32>
    %143 = arith.mulf %5, %142 : vector<16x16xf32>
    %144 = arith.addf %140, %143 : vector<16x16xf32>
    %c26 = arith.constant 26 : index
    %145 = memref.load %arg2[%c26] : memref<48xf32, #tpu.memory_space<smem>>
    %146 = vector.broadcast %145 : f32 to vector<16x16xf32>
    %147 = arith.mulf %6, %146 : vector<16x16xf32>
    %148 = arith.addf %144, %147 : vector<16x16xf32>
    %c27 = arith.constant 27 : index
    %149 = memref.load %arg2[%c27] : memref<48xf32, #tpu.memory_space<smem>>
    %150 = vector.broadcast %149 : f32 to vector<16x16xf32>
    %151 = arith.mulf %11, %150 : vector<16x16xf32>
    %152 = arith.addf %148, %151 : vector<16x16xf32>
    %c28 = arith.constant 28 : index
    %153 = memref.load %arg2[%c28] : memref<48xf32, #tpu.memory_space<smem>>
    %154 = vector.broadcast %153 : f32 to vector<16x16xf32>
    %155 = arith.mulf %12, %154 : vector<16x16xf32>
    %156 = arith.addf %152, %155 : vector<16x16xf32>
    %c29 = arith.constant 29 : index
    %157 = memref.load %arg2[%c29] : memref<48xf32, #tpu.memory_space<smem>>
    %158 = vector.broadcast %157 : f32 to vector<16x16xf32>
    %159 = arith.mulf %13, %158 : vector<16x16xf32>
    %160 = arith.addf %156, %159 : vector<16x16xf32>
    %c30 = arith.constant 30 : index
    %161 = memref.load %arg2[%c30] : memref<48xf32, #tpu.memory_space<smem>>
    %162 = vector.broadcast %161 : f32 to vector<16x16xf32>
    %163 = arith.mulf %18, %162 : vector<16x16xf32>
    %164 = arith.addf %160, %163 : vector<16x16xf32>
    %c31 = arith.constant 31 : index
    %165 = memref.load %arg2[%c31] : memref<48xf32, #tpu.memory_space<smem>>
    %166 = vector.broadcast %165 : f32 to vector<16x16xf32>
    %167 = arith.mulf %19, %166 : vector<16x16xf32>
    %168 = arith.addf %164, %167 : vector<16x16xf32>
    %c32 = arith.constant 32 : index
    %169 = memref.load %arg2[%c32] : memref<48xf32, #tpu.memory_space<smem>>
    %170 = vector.broadcast %169 : f32 to vector<16x16xf32>
    %171 = arith.mulf %20, %170 : vector<16x16xf32>
    %172 = arith.addf %168, %171 : vector<16x16xf32>
    %c33 = arith.constant 33 : index
    %173 = memref.load %arg2[%c33] : memref<48xf32, #tpu.memory_space<smem>>
    %174 = vector.broadcast %173 : f32 to vector<16x16xf32>
    %175 = arith.mulf %25, %174 : vector<16x16xf32>
    %176 = arith.addf %172, %175 : vector<16x16xf32>
    %c34 = arith.constant 34 : index
    %177 = memref.load %arg2[%c34] : memref<48xf32, #tpu.memory_space<smem>>
    %178 = vector.broadcast %177 : f32 to vector<16x16xf32>
    %179 = arith.mulf %26, %178 : vector<16x16xf32>
    %180 = arith.addf %176, %179 : vector<16x16xf32>
    %c35 = arith.constant 35 : index
    %181 = memref.load %arg2[%c35] : memref<48xf32, #tpu.memory_space<smem>>
    %182 = vector.broadcast %181 : f32 to vector<16x16xf32>
    %183 = arith.mulf %27, %182 : vector<16x16xf32>
    %184 = arith.addf %180, %183 : vector<16x16xf32>
    %c2_25 = arith.constant 2 : index
    %185 = memref.load %arg3[%c2_25] : memref<4xf32, #tpu.memory_space<smem>>
    %186 = vector.broadcast %185 : f32 to vector<16x16xf32>
    %187 = arith.mulf %184, %186 : vector<16x16xf32>
    %c2_26 = arith.constant 2 : index
    %188 = memref.load %arg4[%c2_26] : memref<4xf32, #tpu.memory_space<smem>>
    %189 = vector.broadcast %188 : f32 to vector<16x16xf32>
    %190 = arith.addf %187, %189 : vector<16x16xf32>
    %cst_27 = arith.constant 0.000000e+00 : f32
    %191 = vector.broadcast %cst_27 : f32 to vector<16x16xf32>
    %192 = arith.maximumf %190, %191 : vector<16x16xf32>
    %c36 = arith.constant 36 : index
    %193 = memref.load %arg2[%c36] : memref<48xf32, #tpu.memory_space<smem>>
    %194 = vector.broadcast %193 : f32 to vector<16x16xf32>
    %195 = arith.mulf %4, %194 : vector<16x16xf32>
    %c37 = arith.constant 37 : index
    %196 = memref.load %arg2[%c37] : memref<48xf32, #tpu.memory_space<smem>>
    %197 = vector.broadcast %196 : f32 to vector<16x16xf32>
    %198 = arith.mulf %5, %197 : vector<16x16xf32>
    %199 = arith.addf %195, %198 : vector<16x16xf32>
    %c38 = arith.constant 38 : index
    %200 = memref.load %arg2[%c38] : memref<48xf32, #tpu.memory_space<smem>>
    %201 = vector.broadcast %200 : f32 to vector<16x16xf32>
    %202 = arith.mulf %6, %201 : vector<16x16xf32>
    %203 = arith.addf %199, %202 : vector<16x16xf32>
    %c39 = arith.constant 39 : index
    %204 = memref.load %arg2[%c39] : memref<48xf32, #tpu.memory_space<smem>>
    %205 = vector.broadcast %204 : f32 to vector<16x16xf32>
    %206 = arith.mulf %11, %205 : vector<16x16xf32>
    %207 = arith.addf %203, %206 : vector<16x16xf32>
    %c40 = arith.constant 40 : index
    %208 = memref.load %arg2[%c40] : memref<48xf32, #tpu.memory_space<smem>>
    %209 = vector.broadcast %208 : f32 to vector<16x16xf32>
    %210 = arith.mulf %12, %209 : vector<16x16xf32>
    %211 = arith.addf %207, %210 : vector<16x16xf32>
    %c41 = arith.constant 41 : index
    %212 = memref.load %arg2[%c41] : memref<48xf32, #tpu.memory_space<smem>>
    %213 = vector.broadcast %212 : f32 to vector<16x16xf32>
    %214 = arith.mulf %13, %213 : vector<16x16xf32>
    %215 = arith.addf %211, %214 : vector<16x16xf32>
    %c42 = arith.constant 42 : index
    %216 = memref.load %arg2[%c42] : memref<48xf32, #tpu.memory_space<smem>>
    %217 = vector.broadcast %216 : f32 to vector<16x16xf32>
    %218 = arith.mulf %18, %217 : vector<16x16xf32>
    %219 = arith.addf %215, %218 : vector<16x16xf32>
    %c43 = arith.constant 43 : index
    %220 = memref.load %arg2[%c43] : memref<48xf32, #tpu.memory_space<smem>>
    %221 = vector.broadcast %220 : f32 to vector<16x16xf32>
    %222 = arith.mulf %19, %221 : vector<16x16xf32>
    %223 = arith.addf %219, %222 : vector<16x16xf32>
    %c44 = arith.constant 44 : index
    %224 = memref.load %arg2[%c44] : memref<48xf32, #tpu.memory_space<smem>>
    %225 = vector.broadcast %224 : f32 to vector<16x16xf32>
    %226 = arith.mulf %20, %225 : vector<16x16xf32>
    %227 = arith.addf %223, %226 : vector<16x16xf32>
    %c45 = arith.constant 45 : index
    %228 = memref.load %arg2[%c45] : memref<48xf32, #tpu.memory_space<smem>>
    %229 = vector.broadcast %228 : f32 to vector<16x16xf32>
    %230 = arith.mulf %25, %229 : vector<16x16xf32>
    %231 = arith.addf %227, %230 : vector<16x16xf32>
    %c46 = arith.constant 46 : index
    %232 = memref.load %arg2[%c46] : memref<48xf32, #tpu.memory_space<smem>>
    %233 = vector.broadcast %232 : f32 to vector<16x16xf32>
    %234 = arith.mulf %26, %233 : vector<16x16xf32>
    %235 = arith.addf %231, %234 : vector<16x16xf32>
    %c47 = arith.constant 47 : index
    %236 = memref.load %arg2[%c47] : memref<48xf32, #tpu.memory_space<smem>>
    %237 = vector.broadcast %236 : f32 to vector<16x16xf32>
    %238 = arith.mulf %27, %237 : vector<16x16xf32>
    %239 = arith.addf %235, %238 : vector<16x16xf32>
    %c3_28 = arith.constant 3 : index
    %240 = memref.load %arg3[%c3_28] : memref<4xf32, #tpu.memory_space<smem>>
    %241 = vector.broadcast %240 : f32 to vector<16x16xf32>
    %242 = arith.mulf %239, %241 : vector<16x16xf32>
    %c3_29 = arith.constant 3 : index
    %243 = memref.load %arg4[%c3_29] : memref<4xf32, #tpu.memory_space<smem>>
    %244 = vector.broadcast %243 : f32 to vector<16x16xf32>
    %245 = arith.addf %242, %244 : vector<16x16xf32>
    %cst_30 = arith.constant 0.000000e+00 : f32
    %246 = vector.broadcast %cst_30 : f32 to vector<16x16xf32>
    %247 = arith.maximumf %245, %246 : vector<16x16xf32>
    %cst_31 = arith.constant 0.000000e+00 : f32
    %248 = vector.broadcast %cst_31 : f32 to vector<16x1xf32>
    %249 = tpu.concatenate %248, %82, %248 in 1 : vector<16x1xf32>, vector<16x16xf32>, vector<16x1xf32> -> vector<16x18xf32>
    %250 = vector.extract_strided_slice %249 {offsets = [0, 0], sizes = [16, 16], strides = [1, 1]} : vector<16x18xf32> to vector<16x16xf32>
    %251 = vector.extract_strided_slice %249 {offsets = [0, 1], sizes = [16, 16], strides = [1, 1]} : vector<16x18xf32> to vector<16x16xf32>
    %252 = vector.extract_strided_slice %249 {offsets = [0, 2], sizes = [16, 16], strides = [1, 1]} : vector<16x18xf32> to vector<16x16xf32>
    %cst_32 = arith.constant 0.000000e+00 : f32
    %253 = vector.broadcast %cst_32 : f32 to vector<16x1xf32>
    %254 = tpu.concatenate %253, %137, %253 in 1 : vector<16x1xf32>, vector<16x16xf32>, vector<16x1xf32> -> vector<16x18xf32>
    %255 = vector.extract_strided_slice %254 {offsets = [0, 0], sizes = [16, 16], strides = [1, 1]} : vector<16x18xf32> to vector<16x16xf32>
    %256 = vector.extract_strided_slice %254 {offsets = [0, 1], sizes = [16, 16], strides = [1, 1]} : vector<16x18xf32> to vector<16x16xf32>
    %257 = vector.extract_strided_slice %254 {offsets = [0, 2], sizes = [16, 16], strides = [1, 1]} : vector<16x18xf32> to vector<16x16xf32>
    %cst_33 = arith.constant 0.000000e+00 : f32
    %258 = vector.broadcast %cst_33 : f32 to vector<16x1xf32>
    %259 = tpu.concatenate %258, %192, %258 in 1 : vector<16x1xf32>, vector<16x16xf32>, vector<16x1xf32> -> vector<16x18xf32>
    %260 = vector.extract_strided_slice %259 {offsets = [0, 0], sizes = [16, 16], strides = [1, 1]} : vector<16x18xf32> to vector<16x16xf32>
    %261 = vector.extract_strided_slice %259 {offsets = [0, 1], sizes = [16, 16], strides = [1, 1]} : vector<16x18xf32> to vector<16x16xf32>
    %262 = vector.extract_strided_slice %259 {offsets = [0, 2], sizes = [16, 16], strides = [1, 1]} : vector<16x18xf32> to vector<16x16xf32>
    %cst_34 = arith.constant 0.000000e+00 : f32
    %263 = vector.broadcast %cst_34 : f32 to vector<16x1xf32>
    %264 = tpu.concatenate %263, %247, %263 in 1 : vector<16x1xf32>, vector<16x16xf32>, vector<16x1xf32> -> vector<16x18xf32>
    %265 = vector.extract_strided_slice %264 {offsets = [0, 0], sizes = [16, 16], strides = [1, 1]} : vector<16x18xf32> to vector<16x16xf32>
    %266 = vector.extract_strided_slice %264 {offsets = [0, 1], sizes = [16, 16], strides = [1, 1]} : vector<16x18xf32> to vector<16x16xf32>
    %267 = vector.extract_strided_slice %264 {offsets = [0, 2], sizes = [16, 16], strides = [1, 1]} : vector<16x18xf32> to vector<16x16xf32>
    %c0_35 = arith.constant 0 : index
    %268 = memref.load %arg5[%c0_35] : memref<48xf32, #tpu.memory_space<smem>>
    %269 = vector.broadcast %268 : f32 to vector<16x16xf32>
    %270 = arith.mulf %250, %269 : vector<16x16xf32>
    %c1_36 = arith.constant 1 : index
    %271 = memref.load %arg5[%c1_36] : memref<48xf32, #tpu.memory_space<smem>>
    %272 = vector.broadcast %271 : f32 to vector<16x16xf32>
    %273 = arith.mulf %251, %272 : vector<16x16xf32>
    %274 = arith.addf %270, %273 : vector<16x16xf32>
    %c2_37 = arith.constant 2 : index
    %275 = memref.load %arg5[%c2_37] : memref<48xf32, #tpu.memory_space<smem>>
    %276 = vector.broadcast %275 : f32 to vector<16x16xf32>
    %277 = arith.mulf %252, %276 : vector<16x16xf32>
    %278 = arith.addf %274, %277 : vector<16x16xf32>
    %c0_38 = arith.constant 0 : index
    %279 = memref.load %arg6[%c0_38] : memref<16xf32, #tpu.memory_space<smem>>
    %280 = vector.broadcast %279 : f32 to vector<16x16xf32>
    %281 = arith.mulf %278, %280 : vector<16x16xf32>
    %c0_39 = arith.constant 0 : index
    %282 = memref.load %arg7[%c0_39] : memref<16xf32, #tpu.memory_space<smem>>
    %283 = vector.broadcast %282 : f32 to vector<16x16xf32>
    %284 = arith.addf %281, %283 : vector<16x16xf32>
    %cst_40 = arith.constant 0.000000e+00 : f32
    %285 = vector.broadcast %cst_40 : f32 to vector<16x16xf32>
    %286 = arith.maximumf %284, %285 : vector<16x16xf32>
    %c12_41 = arith.constant 12 : index
    %287 = memref.load %arg5[%c12_41] : memref<48xf32, #tpu.memory_space<smem>>
    %288 = vector.broadcast %287 : f32 to vector<16x16xf32>
    %289 = arith.mulf %255, %288 : vector<16x16xf32>
    %c13_42 = arith.constant 13 : index
    %290 = memref.load %arg5[%c13_42] : memref<48xf32, #tpu.memory_space<smem>>
    %291 = vector.broadcast %290 : f32 to vector<16x16xf32>
    %292 = arith.mulf %256, %291 : vector<16x16xf32>
    %293 = arith.addf %289, %292 : vector<16x16xf32>
    %c14_43 = arith.constant 14 : index
    %294 = memref.load %arg5[%c14_43] : memref<48xf32, #tpu.memory_space<smem>>
    %295 = vector.broadcast %294 : f32 to vector<16x16xf32>
    %296 = arith.mulf %257, %295 : vector<16x16xf32>
    %297 = arith.addf %293, %296 : vector<16x16xf32>
    %c4_44 = arith.constant 4 : index
    %298 = memref.load %arg6[%c4_44] : memref<16xf32, #tpu.memory_space<smem>>
    %299 = vector.broadcast %298 : f32 to vector<16x16xf32>
    %300 = arith.mulf %297, %299 : vector<16x16xf32>
    %c4_45 = arith.constant 4 : index
    %301 = memref.load %arg7[%c4_45] : memref<16xf32, #tpu.memory_space<smem>>
    %302 = vector.broadcast %301 : f32 to vector<16x16xf32>
    %303 = arith.addf %300, %302 : vector<16x16xf32>
    %cst_46 = arith.constant 0.000000e+00 : f32
    %304 = vector.broadcast %cst_46 : f32 to vector<16x16xf32>
    %305 = arith.maximumf %303, %304 : vector<16x16xf32>
    %306 = arith.maximumf %286, %305 : vector<16x16xf32>
    %c0_47 = arith.constant 0 : index
    %c0_48 = arith.constant 0 : index
    %c0_49 = arith.constant 0 : index
    %c0_50 = arith.constant 0 : index
    %307 = vector.load %arg8[%c0_47, %c0_48, %c0_49, %c0_50] : memref<1x8x16x16xf32, #tpu.memory_space<vmem>>, vector<1x1x16x16xf32>
    %308 = vector.shape_cast %307 : vector<1x1x16x16xf32> to vector<16x16xf32>
    %309 = vector.shape_cast %306 : vector<16x16xf32> to vector<1x1x16x16xf32>
    tpu.vector_store %arg8[%c0_47, %c0_48, %c0_49, %c0_50], %309 {strides = array<i32>} : memref<1x8x16x16xf32, #tpu.memory_space<vmem>>, vector<1x1x16x16xf32>,
    %c24_51 = arith.constant 24 : index
    %310 = memref.load %arg5[%c24_51] : memref<48xf32, #tpu.memory_space<smem>>
    %311 = vector.broadcast %310 : f32 to vector<16x16xf32>
    %312 = arith.mulf %260, %311 : vector<16x16xf32>
    %c25_52 = arith.constant 25 : index
    %313 = memref.load %arg5[%c25_52] : memref<48xf32, #tpu.memory_space<smem>>
    %314 = vector.broadcast %313 : f32 to vector<16x16xf32>
    %315 = arith.mulf %261, %314 : vector<16x16xf32>
    %316 = arith.addf %312, %315 : vector<16x16xf32>
    %c26_53 = arith.constant 26 : index
    %317 = memref.load %arg5[%c26_53] : memref<48xf32, #tpu.memory_space<smem>>
    %318 = vector.broadcast %317 : f32 to vector<16x16xf32>
    %319 = arith.mulf %262, %318 : vector<16x16xf32>
    %320 = arith.addf %316, %319 : vector<16x16xf32>
    %c8_54 = arith.constant 8 : index
    %321 = memref.load %arg6[%c8_54] : memref<16xf32, #tpu.memory_space<smem>>
    %322 = vector.broadcast %321 : f32 to vector<16x16xf32>
    %323 = arith.mulf %320, %322 : vector<16x16xf32>
    %c8_55 = arith.constant 8 : index
    %324 = memref.load %arg7[%c8_55] : memref<16xf32, #tpu.memory_space<smem>>
    %325 = vector.broadcast %324 : f32 to vector<16x16xf32>
    %326 = arith.addf %323, %325 : vector<16x16xf32>
    %cst_56 = arith.constant 0.000000e+00 : f32
    %327 = vector.broadcast %cst_56 : f32 to vector<16x16xf32>
    %328 = arith.maximumf %326, %327 : vector<16x16xf32>
    %c36_57 = arith.constant 36 : index
    %329 = memref.load %arg5[%c36_57] : memref<48xf32, #tpu.memory_space<smem>>
    %330 = vector.broadcast %329 : f32 to vector<16x16xf32>
    %331 = arith.mulf %265, %330 : vector<16x16xf32>
    %c37_58 = arith.constant 37 : index
    %332 = memref.load %arg5[%c37_58] : memref<48xf32, #tpu.memory_space<smem>>
    %333 = vector.broadcast %332 : f32 to vector<16x16xf32>
    %334 = arith.mulf %266, %333 : vector<16x16xf32>
    %335 = arith.addf %331, %334 : vector<16x16xf32>
    %c38_59 = arith.constant 38 : index
    %336 = memref.load %arg5[%c38_59] : memref<48xf32, #tpu.memory_space<smem>>
    %337 = vector.broadcast %336 : f32 to vector<16x16xf32>
    %338 = arith.mulf %267, %337 : vector<16x16xf32>
    %339 = arith.addf %335, %338 : vector<16x16xf32>
    %c12_60 = arith.constant 12 : index
    %340 = memref.load %arg6[%c12_60] : memref<16xf32, #tpu.memory_space<smem>>
    %341 = vector.broadcast %340 : f32 to vector<16x16xf32>
    %342 = arith.mulf %339, %341 : vector<16x16xf32>
    %c12_61 = arith.constant 12 : index
    %343 = memref.load %arg7[%c12_61] : memref<16xf32, #tpu.memory_space<smem>>
    %344 = vector.broadcast %343 : f32 to vector<16x16xf32>
    %345 = arith.addf %342, %344 : vector<16x16xf32>
    %cst_62 = arith.constant 0.000000e+00 : f32
    %346 = vector.broadcast %cst_62 : f32 to vector<16x16xf32>
    %347 = arith.maximumf %345, %346 : vector<16x16xf32>
    %348 = arith.maximumf %328, %347 : vector<16x16xf32>
    %c0_63 = arith.constant 0 : index
    %c1_64 = arith.constant 1 : index
    %c0_65 = arith.constant 0 : index
    %c0_66 = arith.constant 0 : index
    %349 = vector.load %arg8[%c0_63, %c1_64, %c0_65, %c0_66] : memref<1x8x16x16xf32, #tpu.memory_space<vmem>>, vector<1x1x16x16xf32>
    %350 = vector.shape_cast %349 : vector<1x1x16x16xf32> to vector<16x16xf32>
    %351 = vector.shape_cast %348 : vector<16x16xf32> to vector<1x1x16x16xf32>
    tpu.vector_store %arg8[%c0_63, %c1_64, %c0_65, %c0_66], %351 {strides = array<i32>} : memref<1x8x16x16xf32, #tpu.memory_space<vmem>>, vector<1x1x16x16xf32>,
    %c3_67 = arith.constant 3 : index
    %352 = memref.load %arg5[%c3_67] : memref<48xf32, #tpu.memory_space<smem>>
    %353 = vector.broadcast %352 : f32 to vector<16x16xf32>
    %354 = arith.mulf %250, %353 : vector<16x16xf32>
    %c4_68 = arith.constant 4 : index
    %355 = memref.load %arg5[%c4_68] : memref<48xf32, #tpu.memory_space<smem>>
    %356 = vector.broadcast %355 : f32 to vector<16x16xf32>
    %357 = arith.mulf %251, %356 : vector<16x16xf32>
    %358 = arith.addf %354, %357 : vector<16x16xf32>
    %c5_69 = arith.constant 5 : index
    %359 = memref.load %arg5[%c5_69] : memref<48xf32, #tpu.memory_space<smem>>
    %360 = vector.broadcast %359 : f32 to vector<16x16xf32>
    %361 = arith.mulf %252, %360 : vector<16x16xf32>
    %362 = arith.addf %358, %361 : vector<16x16xf32>
    %c1_70 = arith.constant 1 : index
    %363 = memref.load %arg6[%c1_70] : memref<16xf32, #tpu.memory_space<smem>>
    %364 = vector.broadcast %363 : f32 to vector<16x16xf32>
    %365 = arith.mulf %362, %364 : vector<16x16xf32>
    %c1_71 = arith.constant 1 : index
    %366 = memref.load %arg7[%c1_71] : memref<16xf32, #tpu.memory_space<smem>>
    %367 = vector.broadcast %366 : f32 to vector<16x16xf32>
    %368 = arith.addf %365, %367 : vector<16x16xf32>
    %cst_72 = arith.constant 0.000000e+00 : f32
    %369 = vector.broadcast %cst_72 : f32 to vector<16x16xf32>
    %370 = arith.maximumf %368, %369 : vector<16x16xf32>
    %c15_73 = arith.constant 15 : index
    %371 = memref.load %arg5[%c15_73] : memref<48xf32, #tpu.memory_space<smem>>
    %372 = vector.broadcast %371 : f32 to vector<16x16xf32>
    %373 = arith.mulf %255, %372 : vector<16x16xf32>
    %c16_74 = arith.constant 16 : index
    %374 = memref.load %arg5[%c16_74] : memref<48xf32, #tpu.memory_space<smem>>
    %375 = vector.broadcast %374 : f32 to vector<16x16xf32>
    %376 = arith.mulf %256, %375 : vector<16x16xf32>
    %377 = arith.addf %373, %376 : vector<16x16xf32>
    %c17_75 = arith.constant 17 : index
    %378 = memref.load %arg5[%c17_75] : memref<48xf32, #tpu.memory_space<smem>>
    %379 = vector.broadcast %378 : f32 to vector<16x16xf32>
    %380 = arith.mulf %257, %379 : vector<16x16xf32>
    %381 = arith.addf %377, %380 : vector<16x16xf32>
    %c5_76 = arith.constant 5 : index
    %382 = memref.load %arg6[%c5_76] : memref<16xf32, #tpu.memory_space<smem>>
    %383 = vector.broadcast %382 : f32 to vector<16x16xf32>
    %384 = arith.mulf %381, %383 : vector<16x16xf32>
    %c5_77 = arith.constant 5 : index
    %385 = memref.load %arg7[%c5_77] : memref<16xf32, #tpu.memory_space<smem>>
    %386 = vector.broadcast %385 : f32 to vector<16x16xf32>
    %387 = arith.addf %384, %386 : vector<16x16xf32>
    %cst_78 = arith.constant 0.000000e+00 : f32
    %388 = vector.broadcast %cst_78 : f32 to vector<16x16xf32>
    %389 = arith.maximumf %387, %388 : vector<16x16xf32>
    %390 = arith.maximumf %370, %389 : vector<16x16xf32>
    %c0_79 = arith.constant 0 : index
    %c2_80 = arith.constant 2 : index
    %c0_81 = arith.constant 0 : index
    %c0_82 = arith.constant 0 : index
    %391 = vector.load %arg8[%c0_79, %c2_80, %c0_81, %c0_82] : memref<1x8x16x16xf32, #tpu.memory_space<vmem>>, vector<1x1x16x16xf32>
    %392 = vector.shape_cast %391 : vector<1x1x16x16xf32> to vector<16x16xf32>
    %393 = vector.shape_cast %390 : vector<16x16xf32> to vector<1x1x16x16xf32>
    tpu.vector_store %arg8[%c0_79, %c2_80, %c0_81, %c0_82], %393 {strides = array<i32>} : memref<1x8x16x16xf32, #tpu.memory_space<vmem>>, vector<1x1x16x16xf32>,
    %c27_83 = arith.constant 27 : index
    %394 = memref.load %arg5[%c27_83] : memref<48xf32, #tpu.memory_space<smem>>
    %395 = vector.broadcast %394 : f32 to vector<16x16xf32>
    %396 = arith.mulf %260, %395 : vector<16x16xf32>
    %c28_84 = arith.constant 28 : index
    %397 = memref.load %arg5[%c28_84] : memref<48xf32, #tpu.memory_space<smem>>
    %398 = vector.broadcast %397 : f32 to vector<16x16xf32>
    %399 = arith.mulf %261, %398 : vector<16x16xf32>
    %400 = arith.addf %396, %399 : vector<16x16xf32>
    %c29_85 = arith.constant 29 : index
    %401 = memref.load %arg5[%c29_85] : memref<48xf32, #tpu.memory_space<smem>>
    %402 = vector.broadcast %401 : f32 to vector<16x16xf32>
    %403 = arith.mulf %262, %402 : vector<16x16xf32>
    %404 = arith.addf %400, %403 : vector<16x16xf32>
    %c9_86 = arith.constant 9 : index
    %405 = memref.load %arg6[%c9_86] : memref<16xf32, #tpu.memory_space<smem>>
    %406 = vector.broadcast %405 : f32 to vector<16x16xf32>
    %407 = arith.mulf %404, %406 : vector<16x16xf32>
    %c9_87 = arith.constant 9 : index
    %408 = memref.load %arg7[%c9_87] : memref<16xf32, #tpu.memory_space<smem>>
    %409 = vector.broadcast %408 : f32 to vector<16x16xf32>
    %410 = arith.addf %407, %409 : vector<16x16xf32>
    %cst_88 = arith.constant 0.000000e+00 : f32
    %411 = vector.broadcast %cst_88 : f32 to vector<16x16xf32>
    %412 = arith.maximumf %410, %411 : vector<16x16xf32>
    %c39_89 = arith.constant 39 : index
    %413 = memref.load %arg5[%c39_89] : memref<48xf32, #tpu.memory_space<smem>>
    %414 = vector.broadcast %413 : f32 to vector<16x16xf32>
    %415 = arith.mulf %265, %414 : vector<16x16xf32>
    %c40_90 = arith.constant 40 : index
    %416 = memref.load %arg5[%c40_90] : memref<48xf32, #tpu.memory_space<smem>>
    %417 = vector.broadcast %416 : f32 to vector<16x16xf32>
    %418 = arith.mulf %266, %417 : vector<16x16xf32>
    %419 = arith.addf %415, %418 : vector<16x16xf32>
    %c41_91 = arith.constant 41 : index
    %420 = memref.load %arg5[%c41_91] : memref<48xf32, #tpu.memory_space<smem>>
    %421 = vector.broadcast %420 : f32 to vector<16x16xf32>
    %422 = arith.mulf %267, %421 : vector<16x16xf32>
    %423 = arith.addf %419, %422 : vector<16x16xf32>
    %c13_92 = arith.constant 13 : index
    %424 = memref.load %arg6[%c13_92] : memref<16xf32, #tpu.memory_space<smem>>
    %425 = vector.broadcast %424 : f32 to vector<16x16xf32>
    %426 = arith.mulf %423, %425 : vector<16x16xf32>
    %c13_93 = arith.constant 13 : index
    %427 = memref.load %arg7[%c13_93] : memref<16xf32, #tpu.memory_space<smem>>
    %428 = vector.broadcast %427 : f32 to vector<16x16xf32>
    %429 = arith.addf %426, %428 : vector<16x16xf32>
    %cst_94 = arith.constant 0.000000e+00 : f32
    %430 = vector.broadcast %cst_94 : f32 to vector<16x16xf32>
    %431 = arith.maximumf %429, %430 : vector<16x16xf32>
    %432 = arith.maximumf %412, %431 : vector<16x16xf32>
    %c0_95 = arith.constant 0 : index
    %c3_96 = arith.constant 3 : index
    %c0_97 = arith.constant 0 : index
    %c0_98 = arith.constant 0 : index
    %433 = vector.load %arg8[%c0_95, %c3_96, %c0_97, %c0_98] : memref<1x8x16x16xf32, #tpu.memory_space<vmem>>, vector<1x1x16x16xf32>
    %434 = vector.shape_cast %433 : vector<1x1x16x16xf32> to vector<16x16xf32>
    %435 = vector.shape_cast %432 : vector<16x16xf32> to vector<1x1x16x16xf32>
    tpu.vector_store %arg8[%c0_95, %c3_96, %c0_97, %c0_98], %435 {strides = array<i32>} : memref<1x8x16x16xf32, #tpu.memory_space<vmem>>, vector<1x1x16x16xf32>,
    %c6_99 = arith.constant 6 : index
    %436 = memref.load %arg5[%c6_99] : memref<48xf32, #tpu.memory_space<smem>>
    %437 = vector.broadcast %436 : f32 to vector<16x16xf32>
    %438 = arith.mulf %250, %437 : vector<16x16xf32>
    %c7_100 = arith.constant 7 : index
    %439 = memref.load %arg5[%c7_100] : memref<48xf32, #tpu.memory_space<smem>>
    %440 = vector.broadcast %439 : f32 to vector<16x16xf32>
    %441 = arith.mulf %251, %440 : vector<16x16xf32>
    %442 = arith.addf %438, %441 : vector<16x16xf32>
    %c8_101 = arith.constant 8 : index
    %443 = memref.load %arg5[%c8_101] : memref<48xf32, #tpu.memory_space<smem>>
    %444 = vector.broadcast %443 : f32 to vector<16x16xf32>
    %445 = arith.mulf %252, %444 : vector<16x16xf32>
    %446 = arith.addf %442, %445 : vector<16x16xf32>
    %c2_102 = arith.constant 2 : index
    %447 = memref.load %arg6[%c2_102] : memref<16xf32, #tpu.memory_space<smem>>
    %448 = vector.broadcast %447 : f32 to vector<16x16xf32>
    %449 = arith.mulf %446, %448 : vector<16x16xf32>
    %c2_103 = arith.constant 2 : index
    %450 = memref.load %arg7[%c2_103] : memref<16xf32, #tpu.memory_space<smem>>
    %451 = vector.broadcast %450 : f32 to vector<16x16xf32>
    %452 = arith.addf %449, %451 : vector<16x16xf32>
    %cst_104 = arith.constant 0.000000e+00 : f32
    %453 = vector.broadcast %cst_104 : f32 to vector<16x16xf32>
    %454 = arith.maximumf %452, %453 : vector<16x16xf32>
    %c18_105 = arith.constant 18 : index
    %455 = memref.load %arg5[%c18_105] : memref<48xf32, #tpu.memory_space<smem>>
    %456 = vector.broadcast %455 : f32 to vector<16x16xf32>
    %457 = arith.mulf %255, %456 : vector<16x16xf32>
    %c19_106 = arith.constant 19 : index
    %458 = memref.load %arg5[%c19_106] : memref<48xf32, #tpu.memory_space<smem>>
    %459 = vector.broadcast %458 : f32 to vector<16x16xf32>
    %460 = arith.mulf %256, %459 : vector<16x16xf32>
    %461 = arith.addf %457, %460 : vector<16x16xf32>
    %c20_107 = arith.constant 20 : index
    %462 = memref.load %arg5[%c20_107] : memref<48xf32, #tpu.memory_space<smem>>
    %463 = vector.broadcast %462 : f32 to vector<16x16xf32>
    %464 = arith.mulf %257, %463 : vector<16x16xf32>
    %465 = arith.addf %461, %464 : vector<16x16xf32>
    %c6_108 = arith.constant 6 : index
    %466 = memref.load %arg6[%c6_108] : memref<16xf32, #tpu.memory_space<smem>>
    %467 = vector.broadcast %466 : f32 to vector<16x16xf32>
    %468 = arith.mulf %465, %467 : vector<16x16xf32>
    %c6_109 = arith.constant 6 : index
    %469 = memref.load %arg7[%c6_109] : memref<16xf32, #tpu.memory_space<smem>>
    %470 = vector.broadcast %469 : f32 to vector<16x16xf32>
    %471 = arith.addf %468, %470 : vector<16x16xf32>
    %cst_110 = arith.constant 0.000000e+00 : f32
    %472 = vector.broadcast %cst_110 : f32 to vector<16x16xf32>
    %473 = arith.maximumf %471, %472 : vector<16x16xf32>
    %474 = arith.maximumf %454, %473 : vector<16x16xf32>
    %c0_111 = arith.constant 0 : index
    %c4_112 = arith.constant 4 : index
    %c0_113 = arith.constant 0 : index
    %c0_114 = arith.constant 0 : index
    %475 = vector.load %arg8[%c0_111, %c4_112, %c0_113, %c0_114] : memref<1x8x16x16xf32, #tpu.memory_space<vmem>>, vector<1x1x16x16xf32>
    %476 = vector.shape_cast %475 : vector<1x1x16x16xf32> to vector<16x16xf32>
    %477 = vector.shape_cast %474 : vector<16x16xf32> to vector<1x1x16x16xf32>
    tpu.vector_store %arg8[%c0_111, %c4_112, %c0_113, %c0_114], %477 {strides = array<i32>} : memref<1x8x16x16xf32, #tpu.memory_space<vmem>>, vector<1x1x16x16xf32>,
    %c30_115 = arith.constant 30 : index
    %478 = memref.load %arg5[%c30_115] : memref<48xf32, #tpu.memory_space<smem>>
    %479 = vector.broadcast %478 : f32 to vector<16x16xf32>
    %480 = arith.mulf %260, %479 : vector<16x16xf32>
    %c31_116 = arith.constant 31 : index
    %481 = memref.load %arg5[%c31_116] : memref<48xf32, #tpu.memory_space<smem>>
    %482 = vector.broadcast %481 : f32 to vector<16x16xf32>
    %483 = arith.mulf %261, %482 : vector<16x16xf32>
    %484 = arith.addf %480, %483 : vector<16x16xf32>
    %c32_117 = arith.constant 32 : index
    %485 = memref.load %arg5[%c32_117] : memref<48xf32, #tpu.memory_space<smem>>
    %486 = vector.broadcast %485 : f32 to vector<16x16xf32>
    %487 = arith.mulf %262, %486 : vector<16x16xf32>
    %488 = arith.addf %484, %487 : vector<16x16xf32>
    %c10_118 = arith.constant 10 : index
    %489 = memref.load %arg6[%c10_118] : memref<16xf32, #tpu.memory_space<smem>>
    %490 = vector.broadcast %489 : f32 to vector<16x16xf32>
    %491 = arith.mulf %488, %490 : vector<16x16xf32>
    %c10_119 = arith.constant 10 : index
    %492 = memref.load %arg7[%c10_119] : memref<16xf32, #tpu.memory_space<smem>>
    %493 = vector.broadcast %492 : f32 to vector<16x16xf32>
    %494 = arith.addf %491, %493 : vector<16x16xf32>
    %cst_120 = arith.constant 0.000000e+00 : f32
    %495 = vector.broadcast %cst_120 : f32 to vector<16x16xf32>
    %496 = arith.maximumf %494, %495 : vector<16x16xf32>
    %c42_121 = arith.constant 42 : index
    %497 = memref.load %arg5[%c42_121] : memref<48xf32, #tpu.memory_space<smem>>
    %498 = vector.broadcast %497 : f32 to vector<16x16xf32>
    %499 = arith.mulf %265, %498 : vector<16x16xf32>
    %c43_122 = arith.constant 43 : index
    %500 = memref.load %arg5[%c43_122] : memref<48xf32, #tpu.memory_space<smem>>
    %501 = vector.broadcast %500 : f32 to vector<16x16xf32>
    %502 = arith.mulf %266, %501 : vector<16x16xf32>
    %503 = arith.addf %499, %502 : vector<16x16xf32>
    %c44_123 = arith.constant 44 : index
    %504 = memref.load %arg5[%c44_123] : memref<48xf32, #tpu.memory_space<smem>>
    %505 = vector.broadcast %504 : f32 to vector<16x16xf32>
    %506 = arith.mulf %267, %505 : vector<16x16xf32>
    %507 = arith.addf %503, %506 : vector<16x16xf32>
    %c14_124 = arith.constant 14 : index
    %508 = memref.load %arg6[%c14_124] : memref<16xf32, #tpu.memory_space<smem>>
    %509 = vector.broadcast %508 : f32 to vector<16x16xf32>
    %510 = arith.mulf %507, %509 : vector<16x16xf32>
    %c14_125 = arith.constant 14 : index
    %511 = memref.load %arg7[%c14_125] : memref<16xf32, #tpu.memory_space<smem>>
    %512 = vector.broadcast %511 : f32 to vector<16x16xf32>
    %513 = arith.addf %510, %512 : vector<16x16xf32>
    %cst_126 = arith.constant 0.000000e+00 : f32
    %514 = vector.broadcast %cst_126 : f32 to vector<16x16xf32>
    %515 = arith.maximumf %513, %514 : vector<16x16xf32>
    %516 = arith.maximumf %496, %515 : vector<16x16xf32>
    %c0_127 = arith.constant 0 : index
    %c5_128 = arith.constant 5 : index
    %c0_129 = arith.constant 0 : index
    %c0_130 = arith.constant 0 : index
    %517 = vector.load %arg8[%c0_127, %c5_128, %c0_129, %c0_130] : memref<1x8x16x16xf32, #tpu.memory_space<vmem>>, vector<1x1x16x16xf32>
    %518 = vector.shape_cast %517 : vector<1x1x16x16xf32> to vector<16x16xf32>
    %519 = vector.shape_cast %516 : vector<16x16xf32> to vector<1x1x16x16xf32>
    tpu.vector_store %arg8[%c0_127, %c5_128, %c0_129, %c0_130], %519 {strides = array<i32>} : memref<1x8x16x16xf32, #tpu.memory_space<vmem>>, vector<1x1x16x16xf32>,
    %c9_131 = arith.constant 9 : index
    %520 = memref.load %arg5[%c9_131] : memref<48xf32, #tpu.memory_space<smem>>
    %521 = vector.broadcast %520 : f32 to vector<16x16xf32>
    %522 = arith.mulf %250, %521 : vector<16x16xf32>
    %c10_132 = arith.constant 10 : index
    %523 = memref.load %arg5[%c10_132] : memref<48xf32, #tpu.memory_space<smem>>
    %524 = vector.broadcast %523 : f32 to vector<16x16xf32>
    %525 = arith.mulf %251, %524 : vector<16x16xf32>
    %526 = arith.addf %522, %525 : vector<16x16xf32>
    %c11_133 = arith.constant 11 : index
    %527 = memref.load %arg5[%c11_133] : memref<48xf32, #tpu.memory_space<smem>>
    %528 = vector.broadcast %527 : f32 to vector<16x16xf32>
    %529 = arith.mulf %252, %528 : vector<16x16xf32>
    %530 = arith.addf %526, %529 : vector<16x16xf32>
    %c3_134 = arith.constant 3 : index
    %531 = memref.load %arg6[%c3_134] : memref<16xf32, #tpu.memory_space<smem>>
    %532 = vector.broadcast %531 : f32 to vector<16x16xf32>
    %533 = arith.mulf %530, %532 : vector<16x16xf32>
    %c3_135 = arith.constant 3 : index
    %534 = memref.load %arg7[%c3_135] : memref<16xf32, #tpu.memory_space<smem>>
    %535 = vector.broadcast %534 : f32 to vector<16x16xf32>
    %536 = arith.addf %533, %535 : vector<16x16xf32>
    %cst_136 = arith.constant 0.000000e+00 : f32
    %537 = vector.broadcast %cst_136 : f32 to vector<16x16xf32>
    %538 = arith.maximumf %536, %537 : vector<16x16xf32>
    %c21_137 = arith.constant 21 : index
    %539 = memref.load %arg5[%c21_137] : memref<48xf32, #tpu.memory_space<smem>>
    %540 = vector.broadcast %539 : f32 to vector<16x16xf32>
    %541 = arith.mulf %255, %540 : vector<16x16xf32>
    %c22_138 = arith.constant 22 : index
    %542 = memref.load %arg5[%c22_138] : memref<48xf32, #tpu.memory_space<smem>>
    %543 = vector.broadcast %542 : f32 to vector<16x16xf32>
    %544 = arith.mulf %256, %543 : vector<16x16xf32>
    %545 = arith.addf %541, %544 : vector<16x16xf32>
    %c23_139 = arith.constant 23 : index
    %546 = memref.load %arg5[%c23_139] : memref<48xf32, #tpu.memory_space<smem>>
    %547 = vector.broadcast %546 : f32 to vector<16x16xf32>
    %548 = arith.mulf %257, %547 : vector<16x16xf32>
    %549 = arith.addf %545, %548 : vector<16x16xf32>
    %c7_140 = arith.constant 7 : index
    %550 = memref.load %arg6[%c7_140] : memref<16xf32, #tpu.memory_space<smem>>
    %551 = vector.broadcast %550 : f32 to vector<16x16xf32>
    %552 = arith.mulf %549, %551 : vector<16x16xf32>
    %c7_141 = arith.constant 7 : index
    %553 = memref.load %arg7[%c7_141] : memref<16xf32, #tpu.memory_space<smem>>
    %554 = vector.broadcast %553 : f32 to vector<16x16xf32>
    %555 = arith.addf %552, %554 : vector<16x16xf32>
    %cst_142 = arith.constant 0.000000e+00 : f32
    %556 = vector.broadcast %cst_142 : f32 to vector<16x16xf32>
    %557 = arith.maximumf %555, %556 : vector<16x16xf32>
    %558 = arith.maximumf %538, %557 : vector<16x16xf32>
    %c0_143 = arith.constant 0 : index
    %c6_144 = arith.constant 6 : index
    %c0_145 = arith.constant 0 : index
    %c0_146 = arith.constant 0 : index
    %559 = vector.load %arg8[%c0_143, %c6_144, %c0_145, %c0_146] : memref<1x8x16x16xf32, #tpu.memory_space<vmem>>, vector<1x1x16x16xf32>
    %560 = vector.shape_cast %559 : vector<1x1x16x16xf32> to vector<16x16xf32>
    %561 = vector.shape_cast %558 : vector<16x16xf32> to vector<1x1x16x16xf32>
    tpu.vector_store %arg8[%c0_143, %c6_144, %c0_145, %c0_146], %561 {strides = array<i32>} : memref<1x8x16x16xf32, #tpu.memory_space<vmem>>, vector<1x1x16x16xf32>,
    %c33_147 = arith.constant 33 : index
    %562 = memref.load %arg5[%c33_147] : memref<48xf32, #tpu.memory_space<smem>>
    %563 = vector.broadcast %562 : f32 to vector<16x16xf32>
    %564 = arith.mulf %260, %563 : vector<16x16xf32>
    %c34_148 = arith.constant 34 : index
    %565 = memref.load %arg5[%c34_148] : memref<48xf32, #tpu.memory_space<smem>>
    %566 = vector.broadcast %565 : f32 to vector<16x16xf32>
    %567 = arith.mulf %261, %566 : vector<16x16xf32>
    %568 = arith.addf %564, %567 : vector<16x16xf32>
    %c35_149 = arith.constant 35 : index
    %569 = memref.load %arg5[%c35_149] : memref<48xf32, #tpu.memory_space<smem>>
    %570 = vector.broadcast %569 : f32 to vector<16x16xf32>
    %571 = arith.mulf %262, %570 : vector<16x16xf32>
    %572 = arith.addf %568, %571 : vector<16x16xf32>
    %c11_150 = arith.constant 11 : index
    %573 = memref.load %arg6[%c11_150] : memref<16xf32, #tpu.memory_space<smem>>
    %574 = vector.broadcast %573 : f32 to vector<16x16xf32>
    %575 = arith.mulf %572, %574 : vector<16x16xf32>
    %c11_151 = arith.constant 11 : index
    %576 = memref.load %arg7[%c11_151] : memref<16xf32, #tpu.memory_space<smem>>
    %577 = vector.broadcast %576 : f32 to vector<16x16xf32>
    %578 = arith.addf %575, %577 : vector<16x16xf32>
    %cst_152 = arith.constant 0.000000e+00 : f32
    %579 = vector.broadcast %cst_152 : f32 to vector<16x16xf32>
    %580 = arith.maximumf %578, %579 : vector<16x16xf32>
    %c45_153 = arith.constant 45 : index
    %581 = memref.load %arg5[%c45_153] : memref<48xf32, #tpu.memory_space<smem>>
    %582 = vector.broadcast %581 : f32 to vector<16x16xf32>
    %583 = arith.mulf %265, %582 : vector<16x16xf32>
    %c46_154 = arith.constant 46 : index
    %584 = memref.load %arg5[%c46_154] : memref<48xf32, #tpu.memory_space<smem>>
    %585 = vector.broadcast %584 : f32 to vector<16x16xf32>
    %586 = arith.mulf %266, %585 : vector<16x16xf32>
    %587 = arith.addf %583, %586 : vector<16x16xf32>
    %c47_155 = arith.constant 47 : index
    %588 = memref.load %arg5[%c47_155] : memref<48xf32, #tpu.memory_space<smem>>
    %589 = vector.broadcast %588 : f32 to vector<16x16xf32>
    %590 = arith.mulf %267, %589 : vector<16x16xf32>
    %591 = arith.addf %587, %590 : vector<16x16xf32>
    %c15_156 = arith.constant 15 : index
    %592 = memref.load %arg6[%c15_156] : memref<16xf32, #tpu.memory_space<smem>>
    %593 = vector.broadcast %592 : f32 to vector<16x16xf32>
    %594 = arith.mulf %591, %593 : vector<16x16xf32>
    %c15_157 = arith.constant 15 : index
    %595 = memref.load %arg7[%c15_157] : memref<16xf32, #tpu.memory_space<smem>>
    %596 = vector.broadcast %595 : f32 to vector<16x16xf32>
    %597 = arith.addf %594, %596 : vector<16x16xf32>
    %cst_158 = arith.constant 0.000000e+00 : f32
    %598 = vector.broadcast %cst_158 : f32 to vector<16x16xf32>
    %599 = arith.maximumf %597, %598 : vector<16x16xf32>
    %600 = arith.maximumf %580, %599 : vector<16x16xf32>
    %c0_159 = arith.constant 0 : index
    %c7_160 = arith.constant 7 : index
    %c0_161 = arith.constant 0 : index
    %c0_162 = arith.constant 0 : index
    %601 = vector.load %arg8[%c0_159, %c7_160, %c0_161, %c0_162] : memref<1x8x16x16xf32, #tpu.memory_space<vmem>>, vector<1x1x16x16xf32>
    %602 = vector.shape_cast %601 : vector<1x1x16x16xf32> to vector<16x16xf32>
    %603 = vector.shape_cast %600 : vector<16x16xf32> to vector<1x1x16x16xf32>
    tpu.vector_store %arg8[%c0_159, %c7_160, %c0_161, %c0_162], %603 {strides = array<i32>} : memref<1x8x16x16xf32, #tpu.memory_space<vmem>>, vector<1x1x16x16xf32>,
    return
  }
  func.func @transform_0(%arg0: i32) -> (i32, i32, i32, i32) {
    %c0_i32 = arith.constant 0 : i32
    %c0_i32_0 = arith.constant 0 : i32
    %c0_i32_1 = arith.constant 0 : i32
    %c0_i32_2 = arith.constant 0 : i32
    return %arg0, %c0_i32, %c0_i32_0, %c0_i32_1 : i32, i32, i32, i32
  }
  func.func @transform_1(%arg0: i32) -> i32 {
    %c0_i32 = arith.constant 0 : i32
    %c0_i32_0 = arith.constant 0 : i32
    return %c0_i32 : i32
  }
  func.func @transform_2(%arg0: i32) -> i32 {
    %c0_i32 = arith.constant 0 : i32
    %c0_i32_0 = arith.constant 0 : i32
    return %c0_i32 : i32
  }
  func.func @transform_3(%arg0: i32) -> i32 {
    %c0_i32 = arith.constant 0 : i32
    %c0_i32_0 = arith.constant 0 : i32
    return %c0_i32 : i32
  }
  func.func @transform_4(%arg0: i32) -> i32 {
    %c0_i32 = arith.constant 0 : i32
    %c0_i32_0 = arith.constant 0 : i32
    return %c0_i32 : i32
  }
  func.func @transform_5(%arg0: i32) -> i32 {
    %c0_i32 = arith.constant 0 : i32
    %c0_i32_0 = arith.constant 0 : i32
    return %c0_i32 : i32
  }
  func.func @transform_6(%arg0: i32) -> i32 {
    %c0_i32 = arith.constant 0 : i32
    %c0_i32_0 = arith.constant 0 : i32
    return %c0_i32 : i32
  }
  func.func @transform_7(%arg0: i32) -> (i32, i32, i32, i32) {
    %c0_i32 = arith.constant 0 : i32
    %c0_i32_0 = arith.constant 0 : i32
    %c0_i32_1 = arith.constant 0 : i32
    %c0_i32_2 = arith.constant 0 : i32
    return %arg0, %c0_i32, %c0_i32_0, %c0_i32_1 : i32, i32, i32, i32
  }
}

</mosaic_0001>

<llo_original>
// kernel: squeeze.2
$region0: #{squeeze.2}
  %s0 = inlined_call_operand.vmem [shape: f32[4,4,3,1], index: 0, kind: input, shape index: {}]
  %s1 = inlined_call_operand.vmem [shape: f32[48], index: 1, kind: output, shape index: {}]
  $region1: #{squeeze.2} parent=0
    #allocation0 [shape = 'u8[4096]{0}', space=vmem, size = 0x1000, scoped, tag = 'scoped mem for output reshape']
    #allocation1 [shape = 'u8[16384]{0}', space=vmem, size = 0x4000, scoped, tag = 'scoped mem for input reshape']
    %s3 = ssub.s32 16, 1
    %s4 = scalar_lea.vmem %s0, 12
    %v5 = vld [vmem:[%s4] sm:%s3]
    %s6 = scalar_lea.vmem [#allocation1], 24
    %7 = vst [vmem:[%s6] sm:%s3] %v5
    %s8 = scalar_lea.vmem %s0, 8
    %v9 = vld [vmem:[%s8] sm:%s3]
    %s10 = scalar_lea.vmem [#allocation1], 16
    %11 = vst [vmem:[%s10] sm:%s3] %v9
    %s12 = scalar_lea.vmem %s0, 4
    %v13 = vld [vmem:[%s12] sm:%s3]
    %s14 = scalar_lea.vmem [#allocation1], 8
    %15 = vst [vmem:[%s14] sm:%s3] %v13
    %v16 = vld [vmem:[%s0] sm:%s3]
    %17 = vst [vmem:[#allocation1] sm:%s3] %v16
    %v18 = vld [vmem:[#allocation1] sm:$0x1]
    %vm19 = vcmask 23552
    %20 = vst.msk [vmem:[#allocation0] sm:$0x1] %vm19, %v18
    %s21 = scalar_lea.vmem [#allocation1], 27
    %v22 = vld [vmem:[%s21] sm:$0x1]
    %23 = vrot.lane.b32.xlu0 %v22, 45
    %v24 = vpop.permute.xlu0 %23
    %vm25 = vcmask 392552
    %26 = vst.msk [vmem:[#allocation0] sm:$0x1] %vm25, %v24
    %s27 = scalar_lea.vmem [#allocation1], 26
    %v28 = vld [vmem:[%s27] sm:$0x1]
    %29 = vrot.lane.b32.xlu0 %v28, 42
    %v30 = vpop.permute.xlu0 %29
    %vm31 = vcmask 367952
    %32 = vst.msk [vmem:[#allocation0] sm:$0x1] %vm31, %v30
    %s33 = scalar_lea.vmem [#allocation1], 25
    %v34 = vld [vmem:[%s33] sm:$0x1]
    %35 = vrot.lane.b32.xlu0 %v34, 39
    %v36 = vpop.permute.xlu0 %35
    %vm37 = vcmask 343352
    %38 = vst.msk [vmem:[#allocation0] sm:$0x1] %vm37, %v36
    %s39 = scalar_lea.vmem [#allocation1], 24
    %v40 = vld [vmem:[%s39] sm:$0x1]
    %41 = vrot.lane.b32.xlu0 %v40, 36
    %v42 = vpop.permute.xlu0 %41
    %vm43 = vcmask 318752
    %44 = vst.msk [vmem:[#allocation0] sm:$0x1] %vm43, %v42
    %s45 = scalar_lea.vmem [#allocation1], 19
    %v46 = vld [vmem:[%s45] sm:$0x1]
    %47 = vrot.lane.b32.xlu0 %v46, 33
    %v48 = vpop.permute.xlu0 %47
    %vm49 = vcmask 294152
    %50 = vst.msk [vmem:[#allocation0] sm:$0x1] %vm49, %v48
    %s51 = scalar_lea.vmem [#allocation1], 18
    %v52 = vld [vmem:[%s51] sm:$0x1]
    %53 = vrot.lane.b32.xlu0 %v52, 30
    %v54 = vpop.permute.xlu0 %53
    %vm55 = vcmask 269552
    %56 = vst.msk [vmem:[#allocation0] sm:$0x1] %vm55, %v54
    %s57 = scalar_lea.vmem [#allocation1], 17
    %v58 = vld [vmem:[%s57] sm:$0x1]
    %59 = vrot.lane.b32.xlu0 %v58, 27
    %v60 = vpop.permute.xlu0 %59
    %vm61 = vcmask 244952
    %62 = vst.msk [vmem:[#allocation0] sm:$0x1] %vm61, %v60
    %s63 = scalar_lea.vmem [#allocation1], 16
    %v64 = vld [vmem:[%s63] sm:$0x1]
    %65 = vrot.lane.b32.xlu0 %v64, 24
    %v66 = vpop.permute.xlu0 %65
    %vm67 = vcmask 220352
    %68 = vst.msk [vmem:[#allocation0] sm:$0x1] %vm67, %v66
    %s69 = scalar_lea.vmem [#allocation1], 11
    %v70 = vld [vmem:[%s69] sm:$0x1]
    %71 = vrot.lane.b32.xlu0 %v70, 21
    %v72 = vpop.permute.xlu0 %71
    %vm73 = vcmask 195752
    %74 = vst.msk [vmem:[#allocation0] sm:$0x1] %vm73, %v72
    %s75 = scalar_lea.vmem [#allocation1], 10
    %v76 = vld [vmem:[%s75] sm:$0x1]
    %77 = vrot.lane.b32.xlu0 %v76, 18
    %v78 = vpop.permute.xlu0 %77
    %vm79 = vcmask 171152
    %80 = vst.msk [vmem:[#allocation0] sm:$0x1] %vm79, %v78
    %s81 = scalar_lea.vmem [#allocation1], 9
    %v82 = vld [vmem:[%s81] sm:$0x1]
    %83 = vrot.lane.b32.xlu0 %v82, 15
    %v84 = vpop.permute.xlu0 %83
    %vm85 = vcmask 146552
    %86 = vst.msk [vmem:[#allocation0] sm:$0x1] %vm85, %v84
    %s87 = scalar_lea.vmem [#allocation1], 8
    %v88 = vld [vmem:[%s87] sm:$0x1]
    %89 = vrot.lane.b32.xlu0 %v88, 12
    %v90 = vpop.permute.xlu0 %89
    %vm91 = vcmask 121952
    %92 = vst.msk [vmem:[#allocation0] sm:$0x1] %vm91, %v90
    %s93 = scalar_lea.vmem [#allocation1], 3
    %v94 = vld [vmem:[%s93] sm:$0x1]
    %95 = vrot.lane.b32.xlu0 %v94, 9
    %v96 = vpop.permute.xlu0 %95
    %vm97 = vcmask 97352
    %98 = vst.msk [vmem:[#allocation0] sm:$0x1] %vm97, %v96
    %s99 = scalar_lea.vmem [#allocation1], 2
    %v100 = vld [vmem:[%s99] sm:$0x1]
    %101 = vrot.lane.b32.xlu0 %v100, 6
    %v102 = vpop.permute.xlu0 %101
    %vm103 = vcmask 72752
    %104 = vst.msk [vmem:[#allocation0] sm:$0x1] %vm103, %v102
    %s105 = scalar_lea.vmem [#allocation1], 1
    %v106 = vld [vmem:[%s105] sm:$0x1]
    %107 = vrot.lane.b32.xlu0 %v106, 3
    %v108 = vpop.permute.xlu0 %107
    %vm109 = vcmask 48152
    %110 = vst.msk [vmem:[#allocation0] sm:$0x1] %vm109, %v108
    %s112 = ssub.s32 2, 1
    %v113 = vld [vmem:[#allocation0] sm:%s112]
    %s115 = ssub.s32 2, 1
    %116 = vst [vmem:[%s1] sm:%s115] %v113

// kernel: squeeze.3
$region0: #{squeeze.3}
  %s0 = inlined_call_operand.vmem [shape: f32[16,1,1,3], index: 0, kind: input, shape index: {}]
  %s1 = inlined_call_operand.vmem [shape: f32[48], index: 1, kind: output, shape index: {}]
  $region1: #{squeeze.3} parent=0
    #allocation0 [shape = 'u8[4096]{0}', space=vmem, size = 0x1000, scoped, tag = 'scoped mem for output reshape']
    %v2 = vld [vmem:[%s0] sm:$0x1]
    %vm3 = vcmask 23552
    %4 = vst.msk [vmem:[#allocation0] sm:$0x1] %vm3, %v2
    %s5 = scalar_lea.vmem %s0, 15
    %v6 = vld [vmem:[%s5] sm:$0x1]
    %7 = vrot.lane.b32.xlu0 %v6, 45
    %v8 = vpop.permute.xlu0 %7
    %vm9 = vcmask 392552
    %10 = vst.msk [vmem:[#allocation0] sm:$0x1] %vm9, %v8
    %s11 = scalar_lea.vmem %s0, 14
    %v12 = vld [vmem:[%s11] sm:$0x1]
    %13 = vrot.lane.b32.xlu0 %v12, 42
    %v14 = vpop.permute.xlu0 %13
    %vm15 = vcmask 367952
    %16 = vst.msk [vmem:[#allocation0] sm:$0x1] %vm15, %v14
    %s17 = scalar_lea.vmem %s0, 13
    %v18 = vld [vmem:[%s17] sm:$0x1]
    %19 = vrot.lane.b32.xlu0 %v18, 39
    %v20 = vpop.permute.xlu0 %19
    %vm21 = vcmask 343352
    %22 = vst.msk [vmem:[#allocation0] sm:$0x1] %vm21, %v20
    %s23 = scalar_lea.vmem %s0, 12
    %v24 = vld [vmem:[%s23] sm:$0x1]
    %25 = vrot.lane.b32.xlu0 %v24, 36
    %v26 = vpop.permute.xlu0 %25
    %vm27 = vcmask 318752
    %28 = vst.msk [vmem:[#allocation0] sm:$0x1] %vm27, %v26
    %s29 = scalar_lea.vmem %s0, 11
    %v30 = vld [vmem:[%s29] sm:$0x1]
    %31 = vrot.lane.b32.xlu0 %v30, 33
    %v32 = vpop.permute.xlu0 %31
    %vm33 = vcmask 294152
    %34 = vst.msk [vmem:[#allocation0] sm:$0x1] %vm33, %v32
    %s35 = scalar_lea.vmem %s0, 10
    %v36 = vld [vmem:[%s35] sm:$0x1]
    %37 = vrot.lane.b32.xlu0 %v36, 30
    %v38 = vpop.permute.xlu0 %37
    %vm39 = vcmask 269552
    %40 = vst.msk [vmem:[#allocation0] sm:$0x1] %vm39, %v38
    %s41 = scalar_lea.vmem %s0, 9
    %v42 = vld [vmem:[%s41] sm:$0x1]
    %43 = vrot.lane.b32.xlu0 %v42, 27
    %v44 = vpop.permute.xlu0 %43
    %vm45 = vcmask 244952
    %46 = vst.msk [vmem:[#allocation0] sm:$0x1] %vm45, %v44
    %s47 = scalar_lea.vmem %s0, 8
    %v48 = vld [vmem:[%s47] sm:$0x1]
    %49 = vrot.lane.b32.xlu0 %v48, 24
    %v50 = vpop.permute.xlu0 %49
    %vm51 = vcmask 220352
    %52 = vst.msk [vmem:[#allocation0] sm:$0x1] %vm51, %v50
    %s53 = scalar_lea.vmem %s0, 7
    %v54 = vld [vmem:[%s53] sm:$0x1]
    %55 = vrot.lane.b32.xlu0 %v54, 21
    %v56 = vpop.permute.xlu0 %55
    %vm57 = vcmask 195752
    %58 = vst.msk [vmem:[#allocation0] sm:$0x1] %vm57, %v56
    %s59 = scalar_lea.vmem %s0, 6
    %v60 = vld [vmem:[%s59] sm:$0x1]
    %61 = vrot.lane.b32.xlu0 %v60, 18
    %v62 = vpop.permute.xlu0 %61
    %vm63 = vcmask 171152
    %64 = vst.msk [vmem:[#allocation0] sm:$0x1] %vm63, %v62
    %s65 = scalar_lea.vmem %s0, 5
    %v66 = vld [vmem:[%s65] sm:$0x1]
    %67 = vrot.lane.b32.xlu0 %v66, 15
    %v68 = vpop.permute.xlu0 %67
    %vm69 = vcmask 146552
    %70 = vst.msk [vmem:[#allocation0] sm:$0x1] %vm69, %v68
    %s71 = scalar_lea.vmem %s0, 4
    %v72 = vld [vmem:[%s71] sm:$0x1]
    %73 = vrot.lane.b32.xlu0 %v72, 12
    %v74 = vpop.permute.xlu0 %73
    %vm75 = vcmask 121952
    %76 = vst.msk [vmem:[#allocation0] sm:$0x1] %vm75, %v74
    %s77 = scalar_lea.vmem %s0, 3
    %v78 = vld [vmem:[%s77] sm:$0x1]
    %79 = vrot.lane.b32.xlu0 %v78, 9
    %v80 = vpop.permute.xlu0 %79
    %vm81 = vcmask 97352
    %82 = vst.msk [vmem:[#allocation0] sm:$0x1] %vm81, %v80
    %s83 = scalar_lea.vmem %s0, 2
    %v84 = vld [vmem:[%s83] sm:$0x1]
    %85 = vrot.lane.b32.xlu0 %v84, 6
    %v86 = vpop.permute.xlu0 %85
    %vm87 = vcmask 72752
    %88 = vst.msk [vmem:[#allocation0] sm:$0x1] %vm87, %v86
    %s89 = scalar_lea.vmem %s0, 1
    %v90 = vld [vmem:[%s89] sm:$0x1]
    %91 = vrot.lane.b32.xlu0 %v90, 3
    %v92 = vpop.permute.xlu0 %91
    %vm93 = vcmask 48152
    %94 = vst.msk [vmem:[#allocation0] sm:$0x1] %vm93, %v92
    %s96 = ssub.s32 2, 1
    %v97 = vld [vmem:[#allocation0] sm:%s96]
    %s99 = ssub.s32 2, 1
    %100 = vst [vmem:[%s1] sm:%s99] %v97

// kernel: stem_layer.1
$region0: #{stem_layer.1}
  #allocation0 [shape = 'u32[]', space=smem, size = 0x4, offset = 0x4, fixed_abs, tag = 'smem constant byte address 0x4 - core index']
  #allocation1 [shape = 'u32[72,128]{1,0:T(1,128)}', space=vmem, size = 0x9000, scoped, tag = 'internal scratch']
  %s0 = inlined_call_operand.hbm [shape: f32[2,4,16,16], index: 0, kind: input, shape index: {}]
  %s1 = inlined_call_operand.vmem [shape: f32[48], index: 1, kind: input, shape index: {}]
  %s2 = inlined_call_operand.vmem [shape: f32[4], index: 2, kind: input, shape index: {}]
  %s3 = inlined_call_operand.vmem [shape: f32[4], index: 3, kind: input, shape index: {}]
  %s4 = inlined_call_operand.vmem [shape: f32[48], index: 4, kind: input, shape index: {}]
  %s5 = inlined_call_operand.vmem [shape: f32[16], index: 5, kind: input, shape index: {}]
  %s6 = inlined_call_operand.vmem [shape: f32[16], index: 6, kind: input, shape index: {}]
  %s7 = inlined_call_operand.hbm [shape: f32[2,8,16,16], index: 7, kind: output, shape index: {}]
  %s8 = sld [smem:[#allocation0]]
  $region89: #{stem_layer.1} parent=0
    _
  %s10 = ssub.s32 1, %s8
  %s11 = scalar_select 0, %s10, %s8
  $region1: #{stem_layer.1} parent=0
    #allocation2 [shape = 'u8[65536]{0}', space=vmem, size = 0x10000, scoped, tag = 'input window, operand 0']
    #allocation3 [shape = 's32[2]{0}', space=sflag, size = 0x8, scoped, tag = 'scoped memory for stem_layer.1']
    #allocation4 [shape = 's32[2]{0}', space=sflag, size = 0x8, scoped, tag = 'scoped memory for stem_layer.1']
    #allocation5 [shape = 's32[2]{0}', space=sflag, size = 0x8, scoped, tag = 'scoped memory for stem_layer.1']
    #allocation6 [shape = 'u8[512]{0}', space=smem, size = 0x200, scoped, tag = 'input window, operand 1, single buffered']
    #allocation7 [shape = 'u8[512]{0}', space=smem, size = 0x200, scoped, tag = 'input window, operand 2, single buffered']
    #allocation8 [shape = 's32[1]{0}', space=sflag, size = 0x4, scoped, tag = 'scoped memory for stem_layer.1']
    #allocation9 [shape = 'u8[512]{0}', space=smem, size = 0x200, scoped, tag = 'input window, operand 3, single buffered']
    #allocation10 [shape = 'u8[512]{0}', space=smem, size = 0x200, scoped, tag = 'input window, operand 4, single buffered']
    #allocation11 [shape = 's32[1]{0}', space=sflag, size = 0x4, scoped, tag = 'scoped memory for stem_layer.1']
    #allocation12 [shape = 'u8[512]{0}', space=smem, size = 0x200, scoped, tag = 'input window, operand 5, single buffered']
    #allocation13 [shape = 'u8[512]{0}', space=smem, size = 0x200, scoped, tag = 'input window, operand 6, single buffered']
    #allocation14 [shape = 's32[1]{0}', space=sflag, size = 0x4, scoped, tag = 'scoped memory for stem_layer.1']
    #allocation15 [shape = 'u8[131072]{0}', space=vmem, size = 0x20000, scoped, tag = 'output window, operand 0']
    %12 = vsyncpa [#allocation3], 0
    %s13 = scalar_lea.sflag [#allocation3], 1
    %14 = vsyncpa %s13, 0
    %15 = vsyncpa [#allocation5], 0
    %16 = vsyncpa [#allocation8], 0
    %17 = vsyncpa [#allocation11], 0
    %18 = vsyncpa [#allocation14], 0
    %19 = vsyncpa [#allocation4], 0
    %s20 = scalar_lea.sflag [#allocation4], 1
    %21 = vsyncpa %s20, 0
    loop: start=0, step=1, limit=4
    $region2: #{stem_layer.1} parent=1 // loop_pre_header
      _
    $region3: #{stem_layer.1} parent=1 // loop_header
      %s23 = sphi 0, %s27
      %p24 = scmp.ge.s32.totalorder %s23, 4
      %s33 = sphi 0, %s35
      %s36 = sphi 0, %s33
      %s37 = sphi 0, %s36
      %s53 = sphi 0, %s37
      %s57 = sphi 0, %s57
      %s59 = sphi 0, %s57
      %s60 = sphi 0, %s59
      %s74 = sphi 0, %s60
      %s78 = sphi 0, %s78
      %s80 = sphi 0, %s78
      %s81 = sphi 0, %s80
      %s95 = sphi 0, %s81
      %s99 = sphi 0, %s99
      %s101 = sphi 0, %s99
      %s102 = sphi 0, %s101
      %s116 = sphi 0, %s102
      %s120 = sphi 0, %s120
      %s122 = sphi 0, %s120
      %s123 = sphi 0, %s122
      %s137 = sphi 0, %s123
      %s141 = sphi 0, %s141
      %s143 = sphi 0, %s141
      %s144 = sphi 0, %s143
      %s158 = sphi 0, %s144
      %s162 = sphi 0, %s162
      %s164 = sphi 0, %s162
      %s165 = sphi 0, %s164
      %s179 = sphi 0, %s165
      %s185 = sphi 0, %s187
      %s188 = sphi 0, %s185
      %s189 = sphi 0, %s188
      %s205 = sphi 0, %s189
    $region4: #{stem_layer.1} parent=1 // loop_header_branch
      %26 = sbr.rel (%p24) target = $region8
    $region5: #{stem_layer.1} parent=1 // loop_body
      %s28 = ssub.s32 %s23, 1
      %s29 = ssub.s32 %s23, 2
      %s30 = sadd.s32 %s23, 1
      %s31 = ssub.s32 %s23, %s30
      %p32 = scmp.eq.s32.totalorder %s31, 0
      %s34 = sadd.s32 %s33, 1
      %s35 = scalar_select %p32, %s33, %s34
      %p38 = pneg %p32
      %p39 = scmp.eq.s32.totalorder %s23, 1
      %p40 = por %p38, %p39
      %p41 = scmp.ne.s32.totalorder %s33, %s36
      %p42 = scmp.eq.s32.totalorder %s23, 0
      %p43 = por %p41, %p42
      %p44 = scmp.ne.s32.totalorder %s33, %s36
      %p45 = scmp.eq.s32.totalorder %s28, 1
      %p46 = por %p44, %p45
      %p47 = scmp.ne.s32.totalorder %s36, %s37
      %p48 = scmp.eq.s32.totalorder %s28, 0
      %p49 = por %p47, %p48
      %p50 = scmp.ne.s32.totalorder %s36, %s37
      %p51 = scmp.eq.s32.totalorder %s29, 1
      %p52 = por %p50, %p51
      %p54 = scmp.ne.s32.totalorder %s37, %s53
      %p55 = scmp.eq.s32.totalorder %s29, 0
      %p56 = por %p54, %p55
      %s58 = sadd.s32 %s57, 1
      %p61 = scmp.eq.s32.totalorder %s23, 1
      %p62 = scmp.ne.s32.totalorder %s57, %s59
      %p63 = scmp.eq.s32.totalorder %s23, 0
      %p64 = por %p62, %p63
      %p65 = scmp.ne.s32.totalorder %s57, %s59
      %p66 = scmp.eq.s32.totalorder %s28, 1
      %p67 = por %p65, %p66
      %p68 = scmp.ne.s32.totalorder %s59, %s60
      %p69 = scmp.eq.s32.totalorder %s28, 0
      %p70 = por %p68, %p69
      %p71 = scmp.ne.s32.totalorder %s59, %s60
      %p72 = scmp.eq.s32.totalorder %s29, 1
      %p73 = por %p71, %p72
      %p75 = scmp.ne.s32.totalorder %s60, %s74
      %p76 = scmp.eq.s32.totalorder %s29, 0
      %p77 = por %p75, %p76
      %s79 = sadd.s32 %s78, 1
      %p82 = scmp.eq.s32.totalorder %s23, 1
      %p83 = scmp.ne.s32.totalorder %s78, %s80
      %p84 = scmp.eq.s32.totalorder %s23, 0
      %p85 = por %p83, %p84
      %p86 = scmp.ne.s32.totalorder %s78, %s80
      %p87 = scmp.eq.s32.totalorder %s28, 1
      %p88 = por %p86, %p87
      %p89 = scmp.ne.s32.totalorder %s80, %s81
      %p90 = scmp.eq.s32.totalorder %s28, 0
      %p91 = por %p89, %p90
      %p92 = scmp.ne.s32.totalorder %s80, %s81
      %p93 = scmp.eq.s32.totalorder %s29, 1
      %p94 = por %p92, %p93
      %p96 = scmp.ne.s32.totalorder %s81, %s95
      %p97 = scmp.eq.s32.totalorder %s29, 0
      %p98 = por %p96, %p97
      %s100 = sadd.s32 %s99, 1
      %p103 = scmp.eq.s32.totalorder %s23, 1
      %p104 = scmp.ne.s32.totalorder %s99, %s101
      %p105 = scmp.eq.s32.totalorder %s23, 0
      %p106 = por %p104, %p105
      %p107 = scmp.ne.s32.totalorder %s99, %s101
      %p108 = scmp.eq.s32.totalorder %s28, 1
      %p109 = por %p107, %p108
      %p110 = scmp.ne.s32.totalorder %s101, %s102
      %p111 = scmp.eq.s32.totalorder %s28, 0
      %p112 = por %p110, %p111
      %p113 = scmp.ne.s32.totalorder %s101, %s102
      %p114 = scmp.eq.s32.totalorder %s29, 1
      %p115 = por %p113, %p114
      %p117 = scmp.ne.s32.totalorder %s102, %s116
      %p118 = scmp.eq.s32.totalorder %s29, 0
      %p119 = por %p117, %p118
      %s121 = sadd.s32 %s120, 1
      %p124 = scmp.eq.s32.totalorder %s23, 1
      %p125 = scmp.ne.s32.totalorder %s120, %s122
      %p126 = scmp.eq.s32.totalorder %s23, 0
      %p127 = por %p125, %p126
      %p128 = scmp.ne.s32.totalorder %s120, %s122
      %p129 = scmp.eq.s32.totalorder %s28, 1
      %p130 = por %p128, %p129
      %p131 = scmp.ne.s32.totalorder %s122, %s123
      %p132 = scmp.eq.s32.totalorder %s28, 0
      %p133 = por %p131, %p132
      %p134 = scmp.ne.s32.totalorder %s122, %s123
      %p135 = scmp.eq.s32.totalorder %s29, 1
      %p136 = por %p134, %p135
      %p138 = scmp.ne.s32.totalorder %s123, %s137
      %p139 = scmp.eq.s32.totalorder %s29, 0
      %p140 = por %p138, %p139
      %s142 = sadd.s32 %s141, 1
      %p145 = scmp.eq.s32.totalorder %s23, 1
      %p146 = scmp.ne.s32.totalorder %s141, %s143
      %p147 = scmp.eq.s32.totalorder %s23, 0
      %p148 = por %p146, %p147
      %p149 = scmp.ne.s32.totalorder %s141, %s143
      %p150 = scmp.eq.s32.totalorder %s28, 1
      %p151 = por %p149, %p150
      %p152 = scmp.ne.s32.totalorder %s143, %s144
      %p153 = scmp.eq.s32.totalorder %s28, 0
      %p154 = por %p152, %p153
      %p155 = scmp.ne.s32.totalorder %s143, %s144
      %p156 = scmp.eq.s32.totalorder %s29, 1
      %p157 = por %p155, %p156
      %p159 = scmp.ne.s32.totalorder %s144, %s158
      %p160 = scmp.eq.s32.totalorder %s29, 0
      %p161 = por %p159, %p160
      %s163 = sadd.s32 %s162, 1
      %p166 = scmp.eq.s32.totalorder %s23, 1
      %p167 = scmp.ne.s32.totalorder %s162, %s164
      %p168 = scmp.eq.s32.totalorder %s23, 0
      %p169 = por %p167, %p168
      %p170 = scmp.ne.s32.totalorder %s162, %s164
      %p171 = scmp.eq.s32.totalorder %s28, 1
      %p172 = por %p170, %p171
      %p173 = scmp.ne.s32.totalorder %s164, %s165
      %p174 = scmp.eq.s32.totalorder %s28, 0
      %p175 = por %p173, %p174
      %p176 = scmp.ne.s32.totalorder %s164, %s165
      %p177 = scmp.eq.s32.totalorder %s29, 1
      %p178 = por %p176, %p177
      %p180 = scmp.ne.s32.totalorder %s165, %s179
      %p181 = scmp.eq.s32.totalorder %s29, 0
      %p182 = por %p180, %p181
      %s183 = ssub.s32 %s23, %s30
      %p184 = scmp.eq.s32.totalorder %s183, 0
      %s186 = sadd.s32 %s185, 1
      %s187 = scalar_select %p184, %s185, %s186
      %p190 = pneg %p184
      %p191 = scmp.eq.s32.totalorder %s23, 1
      %p192 = por %p190, %p191
      %p193 = scmp.ne.s32.totalorder %s185, %s188
      %p194 = scmp.eq.s32.totalorder %s23, 0
      %p195 = por %p193, %p194
      %p196 = scmp.ne.s32.totalorder %s185, %s188
      %p197 = scmp.eq.s32.totalorder %s28, 1
      %p198 = por %p196, %p197
      %p199 = scmp.ne.s32.totalorder %s188, %s189
      %p200 = scmp.eq.s32.totalorder %s28, 0
      %p201 = por %p199, %p200
      %p202 = scmp.ne.s32.totalorder %s188, %s189
      %p203 = scmp.eq.s32.totalorder %s29, 1
      %p204 = por %p202, %p203
      %p206 = scmp.ne.s32.totalorder %s189, %s205
      %p207 = scmp.eq.s32.totalorder %s29, 0
      %p208 = por %p206, %p207
      %p209 = scmp.le.s32.totalorder 1, %s23
      %p210 = scmp.lt.s32.totalorder %s23, 3
      %p211 = pnand %p209, %p210
      %p212 = pneg %p211
      // Predicated region
      $region9: #{stem_layer.1} parent=5 // pred_check
        _
      $region10: #{stem_layer.1} parent=5 // pred_check_branch
        %214 = sbr.rel (%p211) target = $region12
      $region11: #{stem_layer.1} parent=5 // pred_region
        %s215 = ssub.s32 %s23, 1
        // Predicated region
        $region13: #{stem_layer.1} parent=11 // pred_check
          %p216 = pneg %p70
        $region14: #{stem_layer.1} parent=11 // pred_check_branch
          %218 = sbr.rel (%p216) target = $region16
        $region15: #{stem_layer.1} parent=11 // pred_region
          %220 = vsyncadd [#allocation5], 0
          %s222 = sshll.u32 %s1, 4
          %s223 = int_to_ptr.vmem [resolvable:$true] %s222
          %225 = dma.vmem_to_smem %s223, 16, [#allocation6], [#allocation5]
        $region16: #{stem_layer.1} parent=11 // pred_fallthru
          _
        // Predicated region
        $region17: #{stem_layer.1} parent=11 // pred_check
          %p226 = pneg %p91
        $region18: #{stem_layer.1} parent=11 // pred_check_branch
          %228 = sbr.rel (%p226) target = $region20
        $region19: #{stem_layer.1} parent=11 // pred_region
          %230 = vsyncadd [#allocation8], 0
          %s232 = sshll.u32 %s2, 4
          %s233 = int_to_ptr.vmem [resolvable:$true] %s232
          %235 = dma.vmem_to_smem %s233, 16, [#allocation7], [#allocation8]
        $region20: #{stem_layer.1} parent=11 // pred_fallthru
          _
        // Predicated region
        $region21: #{stem_layer.1} parent=11 // pred_check
          %p236 = pneg %p112
        $region22: #{stem_layer.1} parent=11 // pred_check_branch
          %238 = sbr.rel (%p236) target = $region24
        $region23: #{stem_layer.1} parent=11 // pred_region
          %240 = vsyncadd [#allocation8], 0
          %s242 = sshll.u32 %s3, 4
          %s243 = int_to_ptr.vmem [resolvable:$true] %s242
          %245 = dma.vmem_to_smem %s243, 16, [#allocation9], [#allocation8]
        $region24: #{stem_layer.1} parent=11 // pred_fallthru
          _
        // Predicated region
        $region25: #{stem_layer.1} parent=11 // pred_check
          %p246 = pneg %p133
        $region26: #{stem_layer.1} parent=11 // pred_check_branch
          %248 = sbr.rel (%p246) target = $region28
        $region27: #{stem_layer.1} parent=11 // pred_region
          %250 = vsyncadd [#allocation11], 0
          %s252 = sshll.u32 %s4, 4
          %s253 = int_to_ptr.vmem [resolvable:$true] %s252
          %255 = dma.vmem_to_smem %s253, 16, [#allocation10], [#allocation11]
        $region28: #{stem_layer.1} parent=11 // pred_fallthru
          _
        // Predicated region
        $region29: #{stem_layer.1} parent=11 // pred_check
          %p256 = pneg %p154
        $region30: #{stem_layer.1} parent=11 // pred_check_branch
          %258 = sbr.rel (%p256) target = $region32
        $region31: #{stem_layer.1} parent=11 // pred_region
          %260 = vsyncadd [#allocation11], 0
          %s262 = sshll.u32 %s5, 4
          %s263 = int_to_ptr.vmem [resolvable:$true] %s262
          %265 = dma.vmem_to_smem %s263, 16, [#allocation12], [#allocation11]
        $region32: #{stem_layer.1} parent=11 // pred_fallthru
          _
        // Predicated region
        $region33: #{stem_layer.1} parent=11 // pred_check
          %p266 = pneg %p175
        $region34: #{stem_layer.1} parent=11 // pred_check_branch
          %268 = sbr.rel (%p266) target = $region36
        $region35: #{stem_layer.1} parent=11 // pred_region
          %270 = vsyncadd [#allocation14], 0
          %s272 = sshll.u32 %s6, 4
          %s273 = int_to_ptr.vmem [resolvable:$true] %s272
          %275 = dma.vmem_to_smem %s273, 16, [#allocation13], [#allocation14]
        $region36: #{stem_layer.1} parent=11 // pred_fallthru
          _
      $region12: #{stem_layer.1} parent=5 // pred_fallthru
        _
      %p276 = scmp.lt.s32.totalorder %s23, 2
      // Predicated region
      $region37: #{stem_layer.1} parent=5 // pred_check
        %p277 = pneg %p276
      $region38: #{stem_layer.1} parent=5 // pred_check_branch
        %279 = sbr.rel (%p277) target = $region40
      $region39: #{stem_layer.1} parent=5 // pred_region
        // Predicated region
        $region41: #{stem_layer.1} parent=39 // pred_check
          %p280 = pneg %p43
        $region42: #{stem_layer.1} parent=39 // pred_check_branch
          %282 = sbr.rel (%p280) target = $region44
        $region43: #{stem_layer.1} parent=39 // pred_region
          %s283 = sand.u32 %s33, 1
          %s284 = scalar_lea.sflag [#allocation3], %s283
          %s285 = sand.u32 %s33, 1
          %s286 = smul.addr %s285, 64
          %s287 = scalar_lea.vmem [#allocation2], %s286
          %289 = vsyncadd %s284, 0
          %s290 = smul.addr %s23, 8
          %s291 = smul.addr %s290, 8
          %s292 = scalar_lea.hbm %s0, %s291
          %s293 = sshll.u32 %s292, 4
          %s294 = int_to_ptr.hbm [resolvable:$true] %s293
          %s295 = sshll.u32 %s287, 4
          %s296 = int_to_ptr.vmem [resolvable:$true] %s295
          %301 = dma.hbm_to_vmem [thread:$0]  %s294, 1024, %s296, %s284, 128, 128, 8
        $region44: #{stem_layer.1} parent=39 // pred_fallthru
          _
      $region40: #{stem_layer.1} parent=5 // pred_fallthru
        _
      %p302 = scmp.le.s32.totalorder 1, %s23
      %p303 = scmp.lt.s32.totalorder %s23, 3
      %p304 = pnand %p302, %p303
      %p305 = pneg %p304
      // Predicated region
      $region45: #{stem_layer.1} parent=5 // pred_check
        _
      $region46: #{stem_layer.1} parent=5 // pred_check_branch
        %307 = sbr.rel (%p304) target = $region48
      $region47: #{stem_layer.1} parent=5 // pred_region
        %s308 = ssub.s32 %s23, 1
        %s309 = sand.u32 %s36, 1
        %s310 = scalar_lea.sflag [#allocation3], %s309
        %s311 = sand.u32 %s36, 1
        %s312 = smul.addr %s311, 64
        %s313 = scalar_lea.vmem [#allocation2], %s312
        // Predicated region
        $region49: #{stem_layer.1} parent=47 // pred_check
          %p314 = pneg %p49
        $region50: #{stem_layer.1} parent=47 // pred_check_branch
          %316 = sbr.rel (%p314) target = $region52
        $region51: #{stem_layer.1} parent=47 // pred_region
          %318 = dma.done %s310, 1024
        $region52: #{stem_layer.1} parent=47 // pred_fallthru
          _
        // Predicated region
        $region53: #{stem_layer.1} parent=47 // pred_check
          %p319 = pneg %p70
        $region54: #{stem_layer.1} parent=47 // pred_check_branch
          %321 = sbr.rel (%p319) target = $region56
        $region55: #{stem_layer.1} parent=47 // pred_region
          %323 = dma.done [#allocation5], 16
        $region56: #{stem_layer.1} parent=47 // pred_fallthru
          _
        // Predicated region
        $region57: #{stem_layer.1} parent=47 // pred_check
          %p324 = pneg %p91
        $region58: #{stem_layer.1} parent=47 // pred_check_branch
          %326 = sbr.rel (%p324) target = $region60
        $region59: #{stem_layer.1} parent=47 // pred_region
          %328 = dma.done [#allocation8], 16
        $region60: #{stem_layer.1} parent=47 // pred_fallthru
          _
        // Predicated region
        $region61: #{stem_layer.1} parent=47 // pred_check
          %p329 = pneg %p112
        $region62: #{stem_layer.1} parent=47 // pred_check_branch
          %331 = sbr.rel (%p329) target = $region64
        $region63: #{stem_layer.1} parent=47 // pred_region
          %333 = dma.done [#allocation8], 16
        $region64: #{stem_layer.1} parent=47 // pred_fallthru
          _
        // Predicated region
        $region65: #{stem_layer.1} parent=47 // pred_check
          %p334 = pneg %p133
        $region66: #{stem_layer.1} parent=47 // pred_check_branch
          %336 = sbr.rel (%p334) target = $region68
        $region67: #{stem_layer.1} parent=47 // pred_region
          %338 = dma.done [#allocation11], 16
        $region68: #{stem_layer.1} parent=47 // pred_fallthru
          _
        // Predicated region
        $region69: #{stem_layer.1} parent=47 // pred_check
          %p339 = pneg %p154
        $region70: #{stem_layer.1} parent=47 // pred_check_branch
          %341 = sbr.rel (%p339) target = $region72
        $region71: #{stem_layer.1} parent=47 // pred_region
          %343 = dma.done [#allocation11], 16
        $region72: #{stem_layer.1} parent=47 // pred_fallthru
          _
        // Predicated region
        $region73: #{stem_layer.1} parent=47 // pred_check
          %p344 = pneg %p175
        $region74: #{stem_layer.1} parent=47 // pred_check_branch
          %346 = sbr.rel (%p344) target = $region76
        $region75: #{stem_layer.1} parent=47 // pred_region
          %348 = dma.done [#allocation14], 16
        $region76: #{stem_layer.1} parent=47 // pred_fallthru
          _
        %349 = sfence
        %s350 = sand.u32 %s36, 1
        %s351 = scalar_lea.sflag [#allocation3], %s350
        %s352 = sand.u32 %s36, 1
        %s353 = smul.addr %s352, 64
        %s354 = scalar_lea.vmem [#allocation2], %s353
        %p355 = pneg %p49
        %p356 = pneg %p46
        %p357 = pneg %p70
        %p358 = pneg %p67
        %p359 = pneg %p91
        %p360 = pneg %p88
        %p361 = pneg %p112
        %p362 = pneg %p109
        %p363 = pneg %p133
        %p364 = pneg %p130
        %p365 = pneg %p154
        %p366 = pneg %p151
        %p367 = pneg %p175
        %p368 = pneg %p172
        %p369 = pneg %p201
        %p370 = pneg %p198
        %s371 = sand.u32 %s188, 1
        %s372 = scalar_lea.sflag [#allocation4], %s371
        %s373 = sand.u32 %s188, 1
        %s374 = smul.addr %s373, 128
        %s375 = scalar_lea.vmem [#allocation15], %s374
        %v376 = vld [vmem:[%s313] sm:$0xff]
        %v377 = vld [vmem:[%s313 + $0x8] sm:$0xff]
        %vm380 = vcmask 1040384
        %v381 = vrot.slane %v376, 7
        %v382 = vrot.slane %v377, 7
        %v383 = vsel %vm380, %v381, %v382
        %v387 = vsel %vm380, 0.0, %v381
        %v388 = vsel %vm380, %v382, 0.0
        %s389 = scalar_lea.vmem %s313, 16 [#allocation2]
        %v390 = vld [vmem:[%s389] sm:$0xff]
        %v391 = vld [vmem:[%s389 + $0x8] sm:$0xff]
        %v394 = vrot.slane %v390, 7
        %v395 = vrot.slane %v391, 7
        %v396 = vsel %vm380, %v394, %v395
        %v400 = vsel %vm380, 0.0, %v394
        %v401 = vsel %vm380, %v395, 0.0
        %s402 = scalar_lea.vmem %s313, 32 [#allocation2]
        %v403 = vld [vmem:[%s402] sm:$0xff]
        %v404 = vld [vmem:[%s402 + $0x8] sm:$0xff]
        %v407 = vrot.slane %v403, 7
        %v408 = vrot.slane %v404, 7
        %v409 = vsel %vm380, %v407, %v408
        %v413 = vsel %vm380, 0.0, %v407
        %v414 = vsel %vm380, %v408, 0.0
        %s415 = scalar_lea.vmem %s313, 48 [#allocation2]
        %v416 = vld [vmem:[%s415] sm:$0xff]
        %v417 = vld [vmem:[%s415 + $0x8] sm:$0xff]
        %v420 = vrot.slane %v416, 7
        %v421 = vrot.slane %v417, 7
        %v422 = vsel %vm380, %v420, %v421
        %v426 = vsel %vm380, 0.0, %v420
        %v427 = vsel %vm380, %v421, 0.0
        %s428 = sld [smem:[#allocation6]]
        %v429 = vstv %s428
        %v430 = vmul.f32 %v387, %v429
        %v431 = vmul.f32 %v383, %v429
        %s432 = sld [smem:[#allocation6 + $0x1]]
        %v433 = vstv %s432
        %v434 = vmul.f32 %v387, %v433
        %v435 = vmul.f32 %v383, %v433
        %v436 = vmul.f32 %v388, %v433
        %vm440 = vcmask 1046528
        %v441 = vrot.slane %v434, 1
        %v442 = vrot.slane %v435, 1
        %v443 = vsel %vm440, %v441, %v442
        %v444 = vrot.slane %v436, 1
        %v445 = vsel %vm440, %v442, %v444
        %v448 = vadd.f32 %v430, %v443
        %v449 = vadd.f32 %v431, %v445
        %s450 = sld [smem:[#allocation6 + $0x2]]
        %v451 = vstv %s450
        %v452 = vmul.f32 %v387, %v451
        %v453 = vmul.f32 %v383, %v451
        %v454 = vmul.f32 %v388, %v451
        %vm458 = vcmask 1045504
        %v459 = vrot.slane %v452, 2
        %v460 = vrot.slane %v453, 2
        %v461 = vsel %vm458, %v459, %v460
        %v462 = vrot.slane %v454, 2
        %v463 = vsel %vm458, %v460, %v462
        %v466 = vadd.f32 %v448, %v461
        %v467 = vadd.f32 %v449, %v463
        %s468 = sld [smem:[#allocation6 + $0x3]]
        %v469 = vstv %s468
        %v470 = vmul.f32 %v400, %v469
        %v471 = vmul.f32 %v396, %v469
        %v472 = vadd.f32 %v466, %v470
        %v473 = vadd.f32 %v467, %v471
        %s474 = sld [smem:[#allocation6 + $0x4]]
        %v475 = vstv %s474
        %v476 = vmul.f32 %v400, %v475
        %v477 = vmul.f32 %v396, %v475
        %v478 = vmul.f32 %v401, %v475
        %v482 = vrot.slane %v476, 1
        %v483 = vrot.slane %v477, 1
        %v484 = vsel %vm440, %v482, %v483
        %v485 = vrot.slane %v478, 1
        %v486 = vsel %vm440, %v483, %v485
        %v489 = vadd.f32 %v472, %v484
        %v490 = vadd.f32 %v473, %v486
        %s491 = sld [smem:[#allocation6 + $0x5]]
        %v492 = vstv %s491
        %v493 = vmul.f32 %v400, %v492
        %v494 = vmul.f32 %v396, %v492
        %v495 = vmul.f32 %v401, %v492
        %v499 = vrot.slane %v493, 2
        %v500 = vrot.slane %v494, 2
        %v501 = vsel %vm458, %v499, %v500
        %v502 = vrot.slane %v495, 2
        %v503 = vsel %vm458, %v500, %v502
        %v506 = vadd.f32 %v489, %v501
        %v507 = vadd.f32 %v490, %v503
        %s508 = sld [smem:[#allocation6 + $0x6]]
        %v509 = vstv %s508
        %v510 = vmul.f32 %v413, %v509
        %v511 = vmul.f32 %v409, %v509
        %v512 = vadd.f32 %v506, %v510
        %v513 = vadd.f32 %v507, %v511
        %s514 = sld [smem:[#allocation6 + $0x7]]
        %v515 = vstv %s514
        %v516 = vmul.f32 %v413, %v515
        %v517 = vmul.f32 %v409, %v515
        %v518 = vmul.f32 %v414, %v515
        %v522 = vrot.slane %v516, 1
        %v523 = vrot.slane %v517, 1
        %v524 = vsel %vm440, %v522, %v523
        %v525 = vrot.slane %v518, 1
        %v526 = vsel %vm440, %v523, %v525
        %v529 = vadd.f32 %v512, %v524
        %v530 = vadd.f32 %v513, %v526
        %s531 = sld [smem:[#allocation6 + $0x8]]
        %v532 = vstv %s531
        %v533 = vmul.f32 %v413, %v532
        %v534 = vmul.f32 %v409, %v532
        %v535 = vmul.f32 %v414, %v532
        %v539 = vrot.slane %v533, 2
        %v540 = vrot.slane %v534, 2
        %v541 = vsel %vm458, %v539, %v540
        %v542 = vrot.slane %v535, 2
        %v543 = vsel %vm458, %v540, %v542
        %v546 = vadd.f32 %v529, %v541
        %v547 = vadd.f32 %v530, %v543
        %s548 = sld [smem:[#allocation6 + $0x9]]
        %v549 = vstv %s548
        %v550 = vmul.f32 %v426, %v549
        %v551 = vmul.f32 %v422, %v549
        %v552 = vadd.f32 %v546, %v550
        %v553 = vadd.f32 %v547, %v551
        %s554 = sld [smem:[#allocation6 + $0xa]]
        %v555 = vstv %s554
        %v556 = vmul.f32 %v426, %v555
        %v557 = vmul.f32 %v422, %v555
        %v558 = vmul.f32 %v427, %v555
        %v562 = vrot.slane %v556, 1
        %v563 = vrot.slane %v557, 1
        %v564 = vsel %vm440, %v562, %v563
        %v565 = vrot.slane %v558, 1
        %v566 = vsel %vm440, %v563, %v565
        %v569 = vadd.f32 %v552, %v564
        %v570 = vadd.f32 %v553, %v566
        %s571 = sld [smem:[#allocation6 + $0xb]]
        %v572 = vstv %s571
        %v573 = vmul.f32 %v426, %v572
        %v574 = vmul.f32 %v422, %v572
        %v575 = vmul.f32 %v427, %v572
        %v579 = vrot.slane %v573, 2
        %v580 = vrot.slane %v574, 2
        %v581 = vsel %vm458, %v579, %v580
        %v582 = vrot.slane %v575, 2
        %v583 = vsel %vm458, %v580, %v582
        %v586 = vadd.f32 %v569, %v581
        %v587 = vadd.f32 %v570, %v583
        %s588 = sld [smem:[#allocation7]]
        %v589 = vstv %s588
        %v590 = vmul.f32 %v586, %v589
        %v591 = vmul.f32 %v587, %v589
        %s592 = sld [smem:[#allocation9]]
        %v593 = vstv %s592
        %v594 = vadd.f32 %v590, %v593
        %v595 = vadd.f32 %v591, %v593
        %v596 = vmax.f32 %v594, 0.0
        %v597 = vmax.f32 %v595, 0.0
        %s598 = sld [smem:[#allocation6 + $0xc]]
        %v599 = vstv %s598
        %v600 = vmul.f32 %v387, %v599
        %v601 = vmul.f32 %v383, %v599
        %s602 = sld [smem:[#allocation6 + $0xd]]
        %v603 = vstv %s602
        %v604 = vmul.f32 %v387, %v603
        %v605 = vmul.f32 %v383, %v603
        %v606 = vmul.f32 %v388, %v603
        %v610 = vrot.slane %v604, 1
        %v611 = vrot.slane %v605, 1
        %v612 = vsel %vm440, %v610, %v611
        %v613 = vrot.slane %v606, 1
        %v614 = vsel %vm440, %v611, %v613
        %v617 = vadd.f32 %v600, %v612
        %v618 = vadd.f32 %v601, %v614
        %s619 = sld [smem:[#allocation6 + $0xe]]
        %v620 = vstv %s619
        %v621 = vmul.f32 %v387, %v620
        %v622 = vmul.f32 %v383, %v620
        %v623 = vmul.f32 %v388, %v620
        %v627 = vrot.slane %v621, 2
        %v628 = vrot.slane %v622, 2
        %v629 = vsel %vm458, %v627, %v628
        %v630 = vrot.slane %v623, 2
        %v631 = vsel %vm458, %v628, %v630
        %v634 = vadd.f32 %v617, %v629
        %v635 = vadd.f32 %v618, %v631
        %s636 = sld [smem:[#allocation6 + $0xf]]
        %v637 = vstv %s636
        %v638 = vmul.f32 %v400, %v637
        %v639 = vmul.f32 %v396, %v637
        %v640 = vadd.f32 %v634, %v638
        %v641 = vadd.f32 %v635, %v639
        %s642 = sld [smem:[#allocation6 + $0x10]]
        %v643 = vstv %s642
        %v644 = vmul.f32 %v400, %v643
        %v645 = vmul.f32 %v396, %v643
        %v646 = vmul.f32 %v401, %v643
        %v650 = vrot.slane %v644, 1
        %v651 = vrot.slane %v645, 1
        %v652 = vsel %vm440, %v650, %v651
        %v653 = vrot.slane %v646, 1
        %v654 = vsel %vm440, %v651, %v653
        %v657 = vadd.f32 %v640, %v652
        %v658 = vadd.f32 %v641, %v654
        %s659 = sld [smem:[#allocation6 + $0x11]]
        %v660 = vstv %s659
        %v661 = vmul.f32 %v400, %v660
        %v662 = vmul.f32 %v396, %v660
        %v663 = vmul.f32 %v401, %v660
        %v667 = vrot.slane %v661, 2
        %v668 = vrot.slane %v662, 2
        %v669 = vsel %vm458, %v667, %v668
        %v670 = vrot.slane %v663, 2
        %v671 = vsel %vm458, %v668, %v670
        %v674 = vadd.f32 %v657, %v669
        %v675 = vadd.f32 %v658, %v671
        %s676 = sld [smem:[#allocation6 + $0x12]]
        %v677 = vstv %s676
        %v678 = vmul.f32 %v413, %v677
        %v679 = vmul.f32 %v409, %v677
        %v680 = vadd.f32 %v674, %v678
        %v681 = vadd.f32 %v675, %v679
        %s682 = sld [smem:[#allocation6 + $0x13]]
        %v683 = vstv %s682
        %v684 = vmul.f32 %v413, %v683
        %v685 = vmul.f32 %v409, %v683
        %v686 = vmul.f32 %v414, %v683
        %v690 = vrot.slane %v684, 1
        %v691 = vrot.slane %v685, 1
        %v692 = vsel %vm440, %v690, %v691
        %v693 = vrot.slane %v686, 1
        %v694 = vsel %vm440, %v691, %v693
        %v697 = vadd.f32 %v680, %v692
        %v698 = vadd.f32 %v681, %v694
        %s699 = sld [smem:[#allocation6 + $0x14]]
        %v700 = vstv %s699
        %v701 = vmul.f32 %v413, %v700
        %v702 = vmul.f32 %v409, %v700
        %v703 = vmul.f32 %v414, %v700
        %v707 = vrot.slane %v701, 2
        %v708 = vrot.slane %v702, 2
        %v709 = vsel %vm458, %v707, %v708
        %v710 = vrot.slane %v703, 2
        %v711 = vsel %vm458, %v708, %v710
        %v714 = vadd.f32 %v697, %v709
        %v715 = vadd.f32 %v698, %v711
        %s716 = sld [smem:[#allocation6 + $0x15]]
        %v717 = vstv %s716
        %v718 = vmul.f32 %v426, %v717
        %v719 = vmul.f32 %v422, %v717
        %v720 = vadd.f32 %v714, %v718
        %v721 = vadd.f32 %v715, %v719
        %s722 = sld [smem:[#allocation6 + $0x16]]
        %v723 = vstv %s722
        %v724 = vmul.f32 %v426, %v723
        %v725 = vmul.f32 %v422, %v723
        %v726 = vmul.f32 %v427, %v723
        %v730 = vrot.slane %v724, 1
        %v731 = vrot.slane %v725, 1
        %v732 = vsel %vm440, %v730, %v731
        %v733 = vrot.slane %v726, 1
        %v734 = vsel %vm440, %v731, %v733
        %v737 = vadd.f32 %v720, %v732
        %v738 = vadd.f32 %v721, %v734
        %s739 = sld [smem:[#allocation6 + $0x17]]
        %v740 = vstv %s739
        %v741 = vmul.f32 %v426, %v740
        %v742 = vmul.f32 %v422, %v740
        %v743 = vmul.f32 %v427, %v740
        %v747 = vrot.slane %v741, 2
        %v748 = vrot.slane %v742, 2
        %v749 = vsel %vm458, %v747, %v748
        %v750 = vrot.slane %v743, 2
        %v751 = vsel %vm458, %v748, %v750
        %v754 = vadd.f32 %v737, %v749
        %v755 = vadd.f32 %v738, %v751
        %s756 = sld [smem:[#allocation7 + $0x1]]
        %v757 = vstv %s756
        %v758 = vmul.f32 %v754, %v757
        %v759 = vmul.f32 %v755, %v757
        %s760 = sld [smem:[#allocation9 + $0x1]]
        %v761 = vstv %s760
        %v762 = vadd.f32 %v758, %v761
        %v763 = vadd.f32 %v759, %v761
        %v764 = vmax.f32 %v762, 0.0
        %v765 = vmax.f32 %v763, 0.0
        %s766 = sld [smem:[#allocation6 + $0x18]]
        %v767 = vstv %s766
        %v768 = vmul.f32 %v387, %v767
        %v769 = vmul.f32 %v383, %v767
        %s770 = sld [smem:[#allocation6 + $0x19]]
        %v771 = vstv %s770
        %v772 = vmul.f32 %v387, %v771
        %v773 = vmul.f32 %v383, %v771
        %v774 = vmul.f32 %v388, %v771
        %v778 = vrot.slane %v772, 1
        %v779 = vrot.slane %v773, 1
        %v780 = vsel %vm440, %v778, %v779
        %v781 = vrot.slane %v774, 1
        %v782 = vsel %vm440, %v779, %v781
        %v785 = vadd.f32 %v768, %v780
        %v786 = vadd.f32 %v769, %v782
        %s787 = sld [smem:[#allocation6 + $0x1a]]
        %v788 = vstv %s787
        %v789 = vmul.f32 %v387, %v788
        %v790 = vmul.f32 %v383, %v788
        %v791 = vmul.f32 %v388, %v788
        %v795 = vrot.slane %v789, 2
        %v796 = vrot.slane %v790, 2
        %v797 = vsel %vm458, %v795, %v796
        %v798 = vrot.slane %v791, 2
        %v799 = vsel %vm458, %v796, %v798
        %v802 = vadd.f32 %v785, %v797
        %v803 = vadd.f32 %v786, %v799
        %s804 = sld [smem:[#allocation6 + $0x1b]]
        %v805 = vstv %s804
        %v806 = vmul.f32 %v400, %v805
        %v807 = vmul.f32 %v396, %v805
        %v808 = vadd.f32 %v802, %v806
        %v809 = vadd.f32 %v803, %v807
        %s810 = sld [smem:[#allocation6 + $0x1c]]
        %v811 = vstv %s810
        %v812 = vmul.f32 %v400, %v811
        %v813 = vmul.f32 %v396, %v811
        %v814 = vmul.f32 %v401, %v811
        %v818 = vrot.slane %v812, 1
        %v819 = vrot.slane %v813, 1
        %v820 = vsel %vm440, %v818, %v819
        %v821 = vrot.slane %v814, 1
        %v822 = vsel %vm440, %v819, %v821
        %v825 = vadd.f32 %v808, %v820
        %v826 = vadd.f32 %v809, %v822
        %s827 = sld [smem:[#allocation6 + $0x1d]]
        %v828 = vstv %s827
        %v829 = vmul.f32 %v400, %v828
        %v830 = vmul.f32 %v396, %v828
        %v831 = vmul.f32 %v401, %v828
        %v835 = vrot.slane %v829, 2
        %v836 = vrot.slane %v830, 2
        %v837 = vsel %vm458, %v835, %v836
        %v838 = vrot.slane %v831, 2
        %v839 = vsel %vm458, %v836, %v838
        %v842 = vadd.f32 %v825, %v837
        %v843 = vadd.f32 %v826, %v839
        %s844 = sld [smem:[#allocation6 + $0x1e]]
        %v845 = vstv %s844
        %v846 = vmul.f32 %v413, %v845
        %v847 = vmul.f32 %v409, %v845
        %v848 = vadd.f32 %v842, %v846
        %v849 = vadd.f32 %v843, %v847
        %s850 = sld [smem:[#allocation6 + $0x1f]]
        %v851 = vstv %s850
        %v852 = vmul.f32 %v413, %v851
        %v853 = vmul.f32 %v409, %v851
        %v854 = vmul.f32 %v414, %v851
        %v858 = vrot.slane %v852, 1
        %v859 = vrot.slane %v853, 1
        %v860 = vsel %vm440, %v858, %v859
        %v861 = vrot.slane %v854, 1
        %v862 = vsel %vm440, %v859, %v861
        %v865 = vadd.f32 %v848, %v860
        %v866 = vadd.f32 %v849, %v862
        %s867 = sld [smem:[#allocation6 + $0x20]]
        %v868 = vstv %s867
        %v869 = vmul.f32 %v413, %v868
        %v870 = vmul.f32 %v409, %v868
        %v871 = vmul.f32 %v414, %v868
        %v875 = vrot.slane %v869, 2
        %v876 = vrot.slane %v870, 2
        %v877 = vsel %vm458, %v875, %v876
        %v878 = vrot.slane %v871, 2
        %v879 = vsel %vm458, %v876, %v878
        %v882 = vadd.f32 %v865, %v877
        %v883 = vadd.f32 %v866, %v879
        %s884 = sld [smem:[#allocation6 + $0x21]]
        %v885 = vstv %s884
        %v886 = vmul.f32 %v426, %v885
        %v887 = vmul.f32 %v422, %v885
        %v888 = vadd.f32 %v882, %v886
        %v889 = vadd.f32 %v883, %v887
        %s890 = sld [smem:[#allocation6 + $0x22]]
        %v891 = vstv %s890
        %v892 = vmul.f32 %v426, %v891
        %v893 = vmul.f32 %v422, %v891
        %v894 = vmul.f32 %v427, %v891
        %v898 = vrot.slane %v892, 1
        %v899 = vrot.slane %v893, 1
        %v900 = vsel %vm440, %v898, %v899
        %v901 = vrot.slane %v894, 1
        %v902 = vsel %vm440, %v899, %v901
        %v905 = vadd.f32 %v888, %v900
        %v906 = vadd.f32 %v889, %v902
        %s907 = sld [smem:[#allocation6 + $0x23]]
        %v908 = vstv %s907
        %v909 = vmul.f32 %v426, %v908
        %v910 = vmul.f32 %v422, %v908
        %v911 = vmul.f32 %v427, %v908
        %v915 = vrot.slane %v909, 2
        %v916 = vrot.slane %v910, 2
        %v917 = vsel %vm458, %v915, %v916
        %v918 = vrot.slane %v911, 2
        %v919 = vsel %vm458, %v916, %v918
        %v922 = vadd.f32 %v905, %v917
        %v923 = vadd.f32 %v906, %v919
        %s924 = sld [smem:[#allocation7 + $0x2]]
        %v925 = vstv %s924
        %v926 = vmul.f32 %v922, %v925
        %v927 = vmul.f32 %v923, %v925
        %s928 = sld [smem:[#allocation9 + $0x2]]
        %v929 = vstv %s928
        %v930 = vadd.f32 %v926, %v929
        %v931 = vadd.f32 %v927, %v929
        %v932 = vmax.f32 %v930, 0.0
        %v933 = vmax.f32 %v931, 0.0
        %s934 = sld [smem:[#allocation6 + $0x24]]
        %v935 = vstv %s934
        %v936 = vmul.f32 %v387, %v935
        %v937 = vmul.f32 %v383, %v935
        %s938 = sld [smem:[#allocation6 + $0x25]]
        %v939 = vstv %s938
        %v940 = vmul.f32 %v387, %v939
        %v941 = vmul.f32 %v383, %v939
        %v942 = vmul.f32 %v388, %v939
        %v946 = vrot.slane %v940, 1
        %v947 = vrot.slane %v941, 1
        %v948 = vsel %vm440, %v946, %v947
        %v949 = vrot.slane %v942, 1
        %v950 = vsel %vm440, %v947, %v949
        %v953 = vadd.f32 %v936, %v948
        %v954 = vadd.f32 %v937, %v950
        %s955 = sld [smem:[#allocation6 + $0x26]]
        %v956 = vstv %s955
        %v957 = vmul.f32 %v387, %v956
        %v958 = vmul.f32 %v383, %v956
        %v959 = vmul.f32 %v388, %v956
        %v963 = vrot.slane %v957, 2
        %v964 = vrot.slane %v958, 2
        %v965 = vsel %vm458, %v963, %v964
        %v966 = vrot.slane %v959, 2
        %v967 = vsel %vm458, %v964, %v966
        %v970 = vadd.f32 %v953, %v965
        %v971 = vadd.f32 %v954, %v967
        %s972 = sld [smem:[#allocation6 + $0x27]]
        %v973 = vstv %s972
        %v974 = vmul.f32 %v400, %v973
        %v975 = vmul.f32 %v396, %v973
        %v976 = vadd.f32 %v970, %v974
        %v977 = vadd.f32 %v971, %v975
        %s978 = sld [smem:[#allocation6 + $0x28]]
        %v979 = vstv %s978
        %v980 = vmul.f32 %v400, %v979
        %v981 = vmul.f32 %v396, %v979
        %v982 = vmul.f32 %v401, %v979
        %v986 = vrot.slane %v980, 1
        %v987 = vrot.slane %v981, 1
        %v988 = vsel %vm440, %v986, %v987
        %v989 = vrot.slane %v982, 1
        %v990 = vsel %vm440, %v987, %v989
        %v993 = vadd.f32 %v976, %v988
        %v994 = vadd.f32 %v977, %v990
        %s995 = sld [smem:[#allocation6 + $0x29]]
        %v996 = vstv %s995
        %v997 = vmul.f32 %v400, %v996
        %v998 = vmul.f32 %v396, %v996
        %v999 = vmul.f32 %v401, %v996
        %v1003 = vrot.slane %v997, 2
        %v1004 = vrot.slane %v998, 2
        %v1005 = vsel %vm458, %v1003, %v1004
        %v1006 = vrot.slane %v999, 2
        %v1007 = vsel %vm458, %v1004, %v1006
        %v1010 = vadd.f32 %v993, %v1005
        %v1011 = vadd.f32 %v994, %v1007
        %s1012 = sld [smem:[#allocation6 + $0x2a]]
        %v1013 = vstv %s1012
        %v1014 = vmul.f32 %v413, %v1013
        %v1015 = vmul.f32 %v409, %v1013
        %v1016 = vadd.f32 %v1010, %v1014
        %v1017 = vadd.f32 %v1011, %v1015
        %s1018 = sld [smem:[#allocation6 + $0x2b]]
        %v1019 = vstv %s1018
        %v1020 = vmul.f32 %v413, %v1019
        %v1021 = vmul.f32 %v409, %v1019
        %v1022 = vmul.f32 %v414, %v1019
        %v1026 = vrot.slane %v1020, 1
        %v1027 = vrot.slane %v1021, 1
        %v1028 = vsel %vm440, %v1026, %v1027
        %v1029 = vrot.slane %v1022, 1
        %v1030 = vsel %vm440, %v1027, %v1029
        %v1033 = vadd.f32 %v1016, %v1028
        %v1034 = vadd.f32 %v1017, %v1030
        %s1035 = sld [smem:[#allocation6 + $0x2c]]
        %v1036 = vstv %s1035
        %v1037 = vmul.f32 %v413, %v1036
        %v1038 = vmul.f32 %v409, %v1036
        %v1039 = vmul.f32 %v414, %v1036
        %v1043 = vrot.slane %v1037, 2
        %v1044 = vrot.slane %v1038, 2
        %v1045 = vsel %vm458, %v1043, %v1044
        %v1046 = vrot.slane %v1039, 2
        %v1047 = vsel %vm458, %v1044, %v1046
        %v1050 = vadd.f32 %v1033, %v1045
        %v1051 = vadd.f32 %v1034, %v1047
        %s1052 = sld [smem:[#allocation6 + $0x2d]]
        %v1053 = vstv %s1052
        %v1054 = vmul.f32 %v426, %v1053
        %v1055 = vmul.f32 %v422, %v1053
        %v1056 = vadd.f32 %v1050, %v1054
        %v1057 = vadd.f32 %v1051, %v1055
        %s1058 = sld [smem:[#allocation6 + $0x2e]]
        %v1059 = vstv %s1058
        %v1060 = vmul.f32 %v426, %v1059
        %v1061 = vmul.f32 %v422, %v1059
        %v1062 = vmul.f32 %v427, %v1059
        %v1066 = vrot.slane %v1060, 1
        %v1067 = vrot.slane %v1061, 1
        %v1068 = vsel %vm440, %v1066, %v1067
        %v1069 = vrot.slane %v1062, 1
        %v1070 = vsel %vm440, %v1067, %v1069
        %v1073 = vadd.f32 %v1056, %v1068
        %v1074 = vadd.f32 %v1057, %v1070
        %s1075 = sld [smem:[#allocation6 + $0x2f]]
        %v1076 = vstv %s1075
        %v1077 = vmul.f32 %v426, %v1076
        %v1078 = vmul.f32 %v422, %v1076
        %v1079 = vmul.f32 %v427, %v1076
        %v1083 = vrot.slane %v1077, 2
        %v1084 = vrot.slane %v1078, 2
        %v1085 = vsel %vm458, %v1083, %v1084
        %v1086 = vrot.slane %v1079, 2
        %v1087 = vsel %vm458, %v1084, %v1086
        %v1090 = vadd.f32 %v1073, %v1085
        %v1091 = vadd.f32 %v1074, %v1087
        %s1092 = sld [smem:[#allocation7 + $0x3]]
        %v1093 = vstv %s1092
        %v1094 = vmul.f32 %v1090, %v1093
        %v1095 = vmul.f32 %v1091, %v1093
        %s1096 = sld [smem:[#allocation9 + $0x3]]
        %v1097 = vstv %s1096
        %v1098 = vadd.f32 %v1094, %v1097
        %v1099 = vadd.f32 %v1095, %v1097
        %v1100 = vmax.f32 %v1098, 0.0
        %v1101 = vmax.f32 %v1099, 0.0
        %1104 = vrot.lane.b32.xlu0 %v596, 1
        %v1105 = vpop.permute.xlu0 %1104
        %1106 = vrot.lane.b32.xlu0 %v597, 1
        %v1107 = vpop.permute.xlu0 %1106
        %vm1110 = vcmask 7168
        %v1111 = vsel %vm1110, 0.0, %v1105
        %v1112 = vsel %vm1110, 0.0, %v1107
        %vm1113 = vcmask 138240
        %v1114 = vsel %vm1113, %v1111, 0.0
        %v1115 = vsel %vm1113, %v1112, 0.0
        %1118 = vrot.lane.b32.xlu0 %v764, 1
        %v1119 = vpop.permute.xlu0 %1118
        %1120 = vrot.lane.b32.xlu0 %v765, 1
        %v1121 = vpop.permute.xlu0 %1120
        %v1124 = vsel %vm1110, 0.0, %v1119
        %v1125 = vsel %vm1110, 0.0, %v1121
        %v1126 = vsel %vm1113, %v1124, 0.0
        %v1127 = vsel %vm1113, %v1125, 0.0
        %1130 = vrot.lane.b32.xlu0 %v932, 1
        %v1131 = vpop.permute.xlu0 %1130
        %1132 = vrot.lane.b32.xlu0 %v933, 1
        %v1133 = vpop.permute.xlu0 %1132
        %v1136 = vsel %vm1110, 0.0, %v1131
        %v1137 = vsel %vm1110, 0.0, %v1133
        %v1138 = vsel %vm1113, %v1136, 0.0
        %v1139 = vsel %vm1113, %v1137, 0.0
        %1142 = vrot.lane.b32.xlu0 %v1100, 1
        %v1143 = vpop.permute.xlu0 %1142
        %1144 = vrot.lane.b32.xlu0 %v1101, 1
        %v1145 = vpop.permute.xlu0 %1144
        %v1148 = vsel %vm1110, 0.0, %v1143
        %v1149 = vsel %vm1110, 0.0, %v1145
        %v1150 = vsel %vm1113, %v1148, 0.0
        %v1151 = vsel %vm1113, %v1149, 0.0
        %s1152 = sld [smem:[#allocation10]]
        %v1153 = vstv %s1152
        %v1154 = vmul.f32 %v1114, %v1153
        %v1155 = vmul.f32 %v1115, %v1153
        %s1156 = sld [smem:[#allocation10 + $0x1]]
        %v1157 = vstv %s1156
        %v1158 = vmul.f32 %v1114, %v1157
        %v1159 = vmul.f32 %v1115, %v1157
        %1162 = vrot.lane.b32.xlu0 %v1158, 127
        %v1163 = vpop.permute.xlu0 %1162
        %1164 = vrot.lane.b32.xlu0 %v1159, 127
        %v1165 = vpop.permute.xlu0 %1164
        %v1168 = vadd.f32 %v1154, %v1163
        %v1169 = vadd.f32 %v1155, %v1165
        %s1170 = sld [smem:[#allocation10 + $0x2]]
        %v1171 = vstv %s1170
        %v1172 = vmul.f32 %v1114, %v1171
        %v1173 = vmul.f32 %v1115, %v1171
        %1176 = vrot.lane.b32.xlu0 %v1172, 126
        %v1177 = vpop.permute.xlu0 %1176
        %1178 = vrot.lane.b32.xlu0 %v1173, 126
        %v1179 = vpop.permute.xlu0 %1178
        %v1182 = vadd.f32 %v1168, %v1177
        %v1183 = vadd.f32 %v1169, %v1179
        %s1184 = sld [smem:[#allocation12]]
        %v1185 = vstv %s1184
        %v1186 = vmul.f32 %v1182, %v1185
        %v1187 = vmul.f32 %v1183, %v1185
        %s1188 = sld [smem:[#allocation13]]
        %v1189 = vstv %s1188
        %v1190 = vadd.f32 %v1186, %v1189
        %v1191 = vadd.f32 %v1187, %v1189
        %v1192 = vmax.f32 %v1190, 0.0
        %v1193 = vmax.f32 %v1191, 0.0
        %s1194 = sld [smem:[#allocation10 + $0xc]]
        %v1195 = vstv %s1194
        %v1196 = vmul.f32 %v1126, %v1195
        %v1197 = vmul.f32 %v1127, %v1195
        %s1198 = sld [smem:[#allocation10 + $0xd]]
        %v1199 = vstv %s1198
        %v1200 = vmul.f32 %v1126, %v1199
        %v1201 = vmul.f32 %v1127, %v1199
        %1204 = vrot.lane.b32.xlu0 %v1200, 127
        %v1205 = vpop.permute.xlu0 %1204
        %1206 = vrot.lane.b32.xlu0 %v1201, 127
        %v1207 = vpop.permute.xlu0 %1206
        %v1210 = vadd.f32 %v1196, %v1205
        %v1211 = vadd.f32 %v1197, %v1207
        %s1212 = sld [smem:[#allocation10 + $0xe]]
        %v1213 = vstv %s1212
        %v1214 = vmul.f32 %v1126, %v1213
        %v1215 = vmul.f32 %v1127, %v1213
        %1218 = vrot.lane.b32.xlu0 %v1214, 126
        %v1219 = vpop.permute.xlu0 %1218
        %1220 = vrot.lane.b32.xlu0 %v1215, 126
        %v1221 = vpop.permute.xlu0 %1220
        %v1224 = vadd.f32 %v1210, %v1219
        %v1225 = vadd.f32 %v1211, %v1221
        %s1226 = sld [smem:[#allocation12 + $0x4]]
        %v1227 = vstv %s1226
        %v1228 = vmul.f32 %v1224, %v1227
        %v1229 = vmul.f32 %v1225, %v1227
        %s1230 = sld [smem:[#allocation13 + $0x4]]
        %v1231 = vstv %s1230
        %v1232 = vadd.f32 %v1228, %v1231
        %v1233 = vadd.f32 %v1229, %v1231
        %v1234 = vmax.f32 %v1232, 0.0
        %v1235 = vmax.f32 %v1233, 0.0
        %v1236 = vmax.f32 %v1192, %v1234
        %v1237 = vmax.f32 %v1193, %v1235
        %vm1238 = vcmask 130048
        %1239 = vst.msk [vmem:[%s375] sm:$0xff] %vm1238, %v1236
        %1240 = vst.msk [vmem:[%s375 + $0x8] sm:$0xff] %vm1238, %v1237
        %s1241 = sld [smem:[#allocation10 + $0x18]]
        %v1242 = vstv %s1241
        %v1243 = vmul.f32 %v1138, %v1242
        %v1244 = vmul.f32 %v1139, %v1242
        %s1245 = sld [smem:[#allocation10 + $0x19]]
        %v1246 = vstv %s1245
        %v1247 = vmul.f32 %v1138, %v1246
        %v1248 = vmul.f32 %v1139, %v1246
        %1251 = vrot.lane.b32.xlu0 %v1247, 127
        %v1252 = vpop.permute.xlu0 %1251
        %1253 = vrot.lane.b32.xlu0 %v1248, 127
        %v1254 = vpop.permute.xlu0 %1253
        %v1257 = vadd.f32 %v1243, %v1252
        %v1258 = vadd.f32 %v1244, %v1254
        %s1259 = sld [smem:[#allocation10 + $0x1a]]
        %v1260 = vstv %s1259
        %v1261 = vmul.f32 %v1138, %v1260
        %v1262 = vmul.f32 %v1139, %v1260
        %1265 = vrot.lane.b32.xlu0 %v1261, 126
        %v1266 = vpop.permute.xlu0 %1265
        %1267 = vrot.lane.b32.xlu0 %v1262, 126
        %v1268 = vpop.permute.xlu0 %1267
        %v1271 = vadd.f32 %v1257, %v1266
        %v1272 = vadd.f32 %v1258, %v1268
        %s1273 = sld [smem:[#allocation12 + $0x8]]
        %v1274 = vstv %s1273
        %v1275 = vmul.f32 %v1271, %v1274
        %v1276 = vmul.f32 %v1272, %v1274
        %s1277 = sld [smem:[#allocation13 + $0x8]]
        %v1278 = vstv %s1277
        %v1279 = vadd.f32 %v1275, %v1278
        %v1280 = vadd.f32 %v1276, %v1278
        %v1281 = vmax.f32 %v1279, 0.0
        %v1282 = vmax.f32 %v1280, 0.0
        %s1283 = sld [smem:[#allocation10 + $0x24]]
        %v1284 = vstv %s1283
        %v1285 = vmul.f32 %v1150, %v1284
        %v1286 = vmul.f32 %v1151, %v1284
        %s1287 = sld [smem:[#allocation10 + $0x25]]
        %v1288 = vstv %s1287
        %v1289 = vmul.f32 %v1150, %v1288
        %v1290 = vmul.f32 %v1151, %v1288
        %1293 = vrot.lane.b32.xlu0 %v1289, 127
        %v1294 = vpop.permute.xlu0 %1293
        %1295 = vrot.lane.b32.xlu0 %v1290, 127
        %v1296 = vpop.permute.xlu0 %1295
        %v1299 = vadd.f32 %v1285, %v1294
        %v1300 = vadd.f32 %v1286, %v1296
        %s1301 = sld [smem:[#allocation10 + $0x26]]
        %v1302 = vstv %s1301
        %v1303 = vmul.f32 %v1150, %v1302
        %v1304 = vmul.f32 %v1151, %v1302
        %1307 = vrot.lane.b32.xlu0 %v1303, 126
        %v1308 = vpop.permute.xlu0 %1307
        %1309 = vrot.lane.b32.xlu0 %v1304, 126
        %v1310 = vpop.permute.xlu0 %1309
        %v1313 = vadd.f32 %v1299, %v1308
        %v1314 = vadd.f32 %v1300, %v1310
        %s1315 = sld [smem:[#allocation12 + $0xc]]
        %v1316 = vstv %s1315
        %v1317 = vmul.f32 %v1313, %v1316
        %v1318 = vmul.f32 %v1314, %v1316
        %s1319 = sld [smem:[#allocation13 + $0xc]]
        %v1320 = vstv %s1319
        %v1321 = vadd.f32 %v1317, %v1320
        %v1322 = vadd.f32 %v1318, %v1320
        %v1323 = vmax.f32 %v1321, 0.0
        %v1324 = vmax.f32 %v1322, 0.0
        %v1325 = vmax.f32 %v1281, %v1323
        %v1326 = vmax.f32 %v1282, %v1324
        %s1327 = scalar_lea.vmem %s375, 16 [#allocation15]
        %1328 = vst.msk [vmem:[%s1327] sm:$0xff] %vm1238, %v1325
        %1329 = vst.msk [vmem:[%s1327 + $0x8] sm:$0xff] %vm1238, %v1326
        %s1330 = sld [smem:[#allocation10 + $0x3]]
        %v1331 = vstv %s1330
        %v1332 = vmul.f32 %v1114, %v1331
        %v1333 = vmul.f32 %v1115, %v1331
        %s1334 = sld [smem:[#allocation10 + $0x4]]
        %v1335 = vstv %s1334
        %v1336 = vmul.f32 %v1114, %v1335
        %v1337 = vmul.f32 %v1115, %v1335
        %1340 = vrot.lane.b32.xlu0 %v1336, 127
        %v1341 = vpop.permute.xlu0 %1340
        %1342 = vrot.lane.b32.xlu0 %v1337, 127
        %v1343 = vpop.permute.xlu0 %1342
        %v1346 = vadd.f32 %v1332, %v1341
        %v1347 = vadd.f32 %v1333, %v1343
        %s1348 = sld [smem:[#allocation10 + $0x5]]
        %v1349 = vstv %s1348
        %v1350 = vmul.f32 %v1114, %v1349
        %v1351 = vmul.f32 %v1115, %v1349
        %1354 = vrot.lane.b32.xlu0 %v1350, 126
        %v1355 = vpop.permute.xlu0 %1354
        %1356 = vrot.lane.b32.xlu0 %v1351, 126
        %v1357 = vpop.permute.xlu0 %1356
        %v1360 = vadd.f32 %v1346, %v1355
        %v1361 = vadd.f32 %v1347, %v1357
        %s1362 = sld [smem:[#allocation12 + $0x1]]
        %v1363 = vstv %s1362
        %v1364 = vmul.f32 %v1360, %v1363
        %v1365 = vmul.f32 %v1361, %v1363
        %s1366 = sld [smem:[#allocation13 + $0x1]]
        %v1367 = vstv %s1366
        %v1368 = vadd.f32 %v1364, %v1367
        %v1369 = vadd.f32 %v1365, %v1367
        %v1370 = vmax.f32 %v1368, 0.0
        %v1371 = vmax.f32 %v1369, 0.0
        %s1372 = sld [smem:[#allocation10 + $0xf]]
        %v1373 = vstv %s1372
        %v1374 = vmul.f32 %v1126, %v1373
        %v1375 = vmul.f32 %v1127, %v1373
        %s1376 = sld [smem:[#allocation10 + $0x10]]
        %v1377 = vstv %s1376
        %v1378 = vmul.f32 %v1126, %v1377
        %v1379 = vmul.f32 %v1127, %v1377
        %1382 = vrot.lane.b32.xlu0 %v1378, 127
        %v1383 = vpop.permute.xlu0 %1382
        %1384 = vrot.lane.b32.xlu0 %v1379, 127
        %v1385 = vpop.permute.xlu0 %1384
        %v1388 = vadd.f32 %v1374, %v1383
        %v1389 = vadd.f32 %v1375, %v1385
        %s1390 = sld [smem:[#allocation10 + $0x11]]
        %v1391 = vstv %s1390
        %v1392 = vmul.f32 %v1126, %v1391
        %v1393 = vmul.f32 %v1127, %v1391
        %1396 = vrot.lane.b32.xlu0 %v1392, 126
        %v1397 = vpop.permute.xlu0 %1396
        %1398 = vrot.lane.b32.xlu0 %v1393, 126
        %v1399 = vpop.permute.xlu0 %1398
        %v1402 = vadd.f32 %v1388, %v1397
        %v1403 = vadd.f32 %v1389, %v1399
        %s1404 = sld [smem:[#allocation12 + $0x5]]
        %v1405 = vstv %s1404
        %v1406 = vmul.f32 %v1402, %v1405
        %v1407 = vmul.f32 %v1403, %v1405
        %s1408 = sld [smem:[#allocation13 + $0x5]]
        %v1409 = vstv %s1408
        %v1410 = vadd.f32 %v1406, %v1409
        %v1411 = vadd.f32 %v1407, %v1409
        %v1412 = vmax.f32 %v1410, 0.0
        %v1413 = vmax.f32 %v1411, 0.0
        %v1414 = vmax.f32 %v1370, %v1412
        %v1415 = vmax.f32 %v1371, %v1413
        %s1416 = scalar_lea.vmem %s375, 32 [#allocation15]
        %1417 = vst.msk [vmem:[%s1416] sm:$0xff] %vm1238, %v1414
        %1418 = vst.msk [vmem:[%s1416 + $0x8] sm:$0xff] %vm1238, %v1415
        %s1419 = sld [smem:[#allocation10 + $0x1b]]
        %v1420 = vstv %s1419
        %v1421 = vmul.f32 %v1138, %v1420
        %v1422 = vmul.f32 %v1139, %v1420
        %s1423 = sld [smem:[#allocation10 + $0x1c]]
        %v1424 = vstv %s1423
        %v1425 = vmul.f32 %v1138, %v1424
        %v1426 = vmul.f32 %v1139, %v1424
        %1429 = vrot.lane.b32.xlu0 %v1425, 127
        %v1430 = vpop.permute.xlu0 %1429
        %1431 = vrot.lane.b32.xlu0 %v1426, 127
        %v1432 = vpop.permute.xlu0 %1431
        %v1435 = vadd.f32 %v1421, %v1430
        %v1436 = vadd.f32 %v1422, %v1432
        %s1437 = sld [smem:[#allocation10 + $0x1d]]
        %v1438 = vstv %s1437
        %v1439 = vmul.f32 %v1138, %v1438
        %v1440 = vmul.f32 %v1139, %v1438
        %1443 = vrot.lane.b32.xlu0 %v1439, 126
        %v1444 = vpop.permute.xlu0 %1443
        %1445 = vrot.lane.b32.xlu0 %v1440, 126
        %v1446 = vpop.permute.xlu0 %1445
        %v1449 = vadd.f32 %v1435, %v1444
        %v1450 = vadd.f32 %v1436, %v1446
        %s1451 = sld [smem:[#allocation12 + $0x9]]
        %v1452 = vstv %s1451
        %v1453 = vmul.f32 %v1449, %v1452
        %v1454 = vmul.f32 %v1450, %v1452
        %s1455 = sld [smem:[#allocation13 + $0x9]]
        %v1456 = vstv %s1455
        %v1457 = vadd.f32 %v1453, %v1456
        %v1458 = vadd.f32 %v1454, %v1456
        %v1459 = vmax.f32 %v1457, 0.0
        %v1460 = vmax.f32 %v1458, 0.0
        %s1461 = sld [smem:[#allocation10 + $0x27]]
        %v1462 = vstv %s1461
        %v1463 = vmul.f32 %v1150, %v1462
        %v1464 = vmul.f32 %v1151, %v1462
        %s1465 = sld [smem:[#allocation10 + $0x28]]
        %v1466 = vstv %s1465
        %v1467 = vmul.f32 %v1150, %v1466
        %v1468 = vmul.f32 %v1151, %v1466
        %1471 = vrot.lane.b32.xlu0 %v1467, 127
        %v1472 = vpop.permute.xlu0 %1471
        %1473 = vrot.lane.b32.xlu0 %v1468, 127
        %v1474 = vpop.permute.xlu0 %1473
        %v1477 = vadd.f32 %v1463, %v1472
        %v1478 = vadd.f32 %v1464, %v1474
        %s1479 = sld [smem:[#allocation10 + $0x29]]
        %v1480 = vstv %s1479
        %v1481 = vmul.f32 %v1150, %v1480
        %v1482 = vmul.f32 %v1151, %v1480
        %1485 = vrot.lane.b32.xlu0 %v1481, 126
        %v1486 = vpop.permute.xlu0 %1485
        %1487 = vrot.lane.b32.xlu0 %v1482, 126
        %v1488 = vpop.permute.xlu0 %1487
        %v1491 = vadd.f32 %v1477, %v1486
        %v1492 = vadd.f32 %v1478, %v1488
        %s1493 = sld [smem:[#allocation12 + $0xd]]
        %v1494 = vstv %s1493
        %v1495 = vmul.f32 %v1491, %v1494
        %v1496 = vmul.f32 %v1492, %v1494
        %s1497 = sld [smem:[#allocation13 + $0xd]]
        %v1498 = vstv %s1497
        %v1499 = vadd.f32 %v1495, %v1498
        %v1500 = vadd.f32 %v1496, %v1498
        %v1501 = vmax.f32 %v1499, 0.0
        %v1502 = vmax.f32 %v1500, 0.0
        %v1503 = vmax.f32 %v1459, %v1501
        %v1504 = vmax.f32 %v1460, %v1502
        %s1505 = scalar_lea.vmem %s375, 48 [#allocation15]
        %1506 = vst.msk [vmem:[%s1505] sm:$0xff] %vm1238, %v1503
        %1507 = vst.msk [vmem:[%s1505 + $0x8] sm:$0xff] %vm1238, %v1504
        %s1508 = sld [smem:[#allocation10 + $0x6]]
        %v1509 = vstv %s1508
        %v1510 = vmul.f32 %v1114, %v1509
        %v1511 = vmul.f32 %v1115, %v1509
        %s1512 = sld [smem:[#allocation10 + $0x7]]
        %v1513 = vstv %s1512
        %v1514 = vmul.f32 %v1114, %v1513
        %v1515 = vmul.f32 %v1115, %v1513
        %1518 = vrot.lane.b32.xlu0 %v1514, 127
        %v1519 = vpop.permute.xlu0 %1518
        %1520 = vrot.lane.b32.xlu0 %v1515, 127
        %v1521 = vpop.permute.xlu0 %1520
        %v1524 = vadd.f32 %v1510, %v1519
        %v1525 = vadd.f32 %v1511, %v1521
        %s1526 = sld [smem:[#allocation10 + $0x8]]
        %v1527 = vstv %s1526
        %v1528 = vmul.f32 %v1114, %v1527
        %v1529 = vmul.f32 %v1115, %v1527
        %1532 = vrot.lane.b32.xlu0 %v1528, 126
        %v1533 = vpop.permute.xlu0 %1532
        %1534 = vrot.lane.b32.xlu0 %v1529, 126
        %v1535 = vpop.permute.xlu0 %1534
        %v1538 = vadd.f32 %v1524, %v1533
        %v1539 = vadd.f32 %v1525, %v1535
        %s1540 = sld [smem:[#allocation12 + $0x2]]
        %v1541 = vstv %s1540
        %v1542 = vmul.f32 %v1538, %v1541
        %v1543 = vmul.f32 %v1539, %v1541
        %s1544 = sld [smem:[#allocation13 + $0x2]]
        %v1545 = vstv %s1544
        %v1546 = vadd.f32 %v1542, %v1545
        %v1547 = vadd.f32 %v1543, %v1545
        %v1548 = vmax.f32 %v1546, 0.0
        %v1549 = vmax.f32 %v1547, 0.0
        %s1550 = sld [smem:[#allocation10 + $0x12]]
        %v1551 = vstv %s1550
        %v1552 = vmul.f32 %v1126, %v1551
        %v1553 = vmul.f32 %v1127, %v1551
        %s1554 = sld [smem:[#allocation10 + $0x13]]
        %v1555 = vstv %s1554
        %v1556 = vmul.f32 %v1126, %v1555
        %v1557 = vmul.f32 %v1127, %v1555
        %1560 = vrot.lane.b32.xlu0 %v1556, 127
        %v1561 = vpop.permute.xlu0 %1560
        %1562 = vrot.lane.b32.xlu0 %v1557, 127
        %v1563 = vpop.permute.xlu0 %1562
        %v1566 = vadd.f32 %v1552, %v1561
        %v1567 = vadd.f32 %v1553, %v1563
        %s1568 = sld [smem:[#allocation10 + $0x14]]
        %v1569 = vstv %s1568
        %v1570 = vmul.f32 %v1126, %v1569
        %v1571 = vmul.f32 %v1127, %v1569
        %1574 = vrot.lane.b32.xlu0 %v1570, 126
        %v1575 = vpop.permute.xlu0 %1574
        %1576 = vrot.lane.b32.xlu0 %v1571, 126
        %v1577 = vpop.permute.xlu0 %1576
        %v1580 = vadd.f32 %v1566, %v1575
        %v1581 = vadd.f32 %v1567, %v1577
        %s1582 = sld [smem:[#allocation12 + $0x6]]
        %v1583 = vstv %s1582
        %v1584 = vmul.f32 %v1580, %v1583
        %v1585 = vmul.f32 %v1581, %v1583
        %s1586 = sld [smem:[#allocation13 + $0x6]]
        %v1587 = vstv %s1586
        %v1588 = vadd.f32 %v1584, %v1587
        %v1589 = vadd.f32 %v1585, %v1587
        %v1590 = vmax.f32 %v1588, 0.0
        %v1591 = vmax.f32 %v1589, 0.0
        %v1592 = vmax.f32 %v1548, %v1590
        %v1593 = vmax.f32 %v1549, %v1591
        %s1594 = scalar_lea.vmem %s375, 64 [#allocation15]
        %1595 = vst.msk [vmem:[%s1594] sm:$0xff] %vm1238, %v1592
        %1596 = vst.msk [vmem:[%s1594 + $0x8] sm:$0xff] %vm1238, %v1593
        %s1597 = sld [smem:[#allocation10 + $0x1e]]
        %v1598 = vstv %s1597
        %v1599 = vmul.f32 %v1138, %v1598
        %v1600 = vmul.f32 %v1139, %v1598
        %s1601 = sld [smem:[#allocation10 + $0x1f]]
        %v1602 = vstv %s1601
        %v1603 = vmul.f32 %v1138, %v1602
        %v1604 = vmul.f32 %v1139, %v1602
        %1607 = vrot.lane.b32.xlu0 %v1603, 127
        %v1608 = vpop.permute.xlu0 %1607
        %1609 = vrot.lane.b32.xlu0 %v1604, 127
        %v1610 = vpop.permute.xlu0 %1609
        %v1613 = vadd.f32 %v1599, %v1608
        %v1614 = vadd.f32 %v1600, %v1610
        %s1615 = sld [smem:[#allocation10 + $0x20]]
        %v1616 = vstv %s1615
        %v1617 = vmul.f32 %v1138, %v1616
        %v1618 = vmul.f32 %v1139, %v1616
        %1621 = vrot.lane.b32.xlu0 %v1617, 126
        %v1622 = vpop.permute.xlu0 %1621
        %1623 = vrot.lane.b32.xlu0 %v1618, 126
        %v1624 = vpop.permute.xlu0 %1623
        %v1627 = vadd.f32 %v1613, %v1622
        %v1628 = vadd.f32 %v1614, %v1624
        %s1629 = sld [smem:[#allocation12 + $0xa]]
        %v1630 = vstv %s1629
        %v1631 = vmul.f32 %v1627, %v1630
        %v1632 = vmul.f32 %v1628, %v1630
        %s1633 = sld [smem:[#allocation13 + $0xa]]
        %v1634 = vstv %s1633
        %v1635 = vadd.f32 %v1631, %v1634
        %v1636 = vadd.f32 %v1632, %v1634
        %v1637 = vmax.f32 %v1635, 0.0
        %v1638 = vmax.f32 %v1636, 0.0
        %s1639 = sld [smem:[#allocation10 + $0x2a]]
        %v1640 = vstv %s1639
        %v1641 = vmul.f32 %v1150, %v1640
        %v1642 = vmul.f32 %v1151, %v1640
        %s1643 = sld [smem:[#allocation10 + $0x2b]]
        %v1644 = vstv %s1643
        %v1645 = vmul.f32 %v1150, %v1644
        %v1646 = vmul.f32 %v1151, %v1644
        %1649 = vrot.lane.b32.xlu0 %v1645, 127
        %v1650 = vpop.permute.xlu0 %1649
        %1651 = vrot.lane.b32.xlu0 %v1646, 127
        %v1652 = vpop.permute.xlu0 %1651
        %v1655 = vadd.f32 %v1641, %v1650
        %v1656 = vadd.f32 %v1642, %v1652
        %s1657 = sld [smem:[#allocation10 + $0x2c]]
        %v1658 = vstv %s1657
        %v1659 = vmul.f32 %v1150, %v1658
        %v1660 = vmul.f32 %v1151, %v1658
        %1663 = vrot.lane.b32.xlu0 %v1659, 126
        %v1664 = vpop.permute.xlu0 %1663
        %1665 = vrot.lane.b32.xlu0 %v1660, 126
        %v1666 = vpop.permute.xlu0 %1665
        %v1669 = vadd.f32 %v1655, %v1664
        %v1670 = vadd.f32 %v1656, %v1666
        %s1671 = sld [smem:[#allocation12 + $0xe]]
        %v1672 = vstv %s1671
        %v1673 = vmul.f32 %v1669, %v1672
        %v1674 = vmul.f32 %v1670, %v1672
        %s1675 = sld [smem:[#allocation13 + $0xe]]
        %v1676 = vstv %s1675
        %v1677 = vadd.f32 %v1673, %v1676
        %v1678 = vadd.f32 %v1674, %v1676
        %v1679 = vmax.f32 %v1677, 0.0
        %v1680 = vmax.f32 %v1678, 0.0
        %v1681 = vmax.f32 %v1637, %v1679
        %v1682 = vmax.f32 %v1638, %v1680
        %s1683 = scalar_lea.vmem %s375, 80 [#allocation15]
        %1684 = vst.msk [vmem:[%s1683] sm:$0xff] %vm1238, %v1681
        %1685 = vst.msk [vmem:[%s1683 + $0x8] sm:$0xff] %vm1238, %v1682
        %s1686 = sld [smem:[#allocation10 + $0x9]]
        %v1687 = vstv %s1686
        %v1688 = vmul.f32 %v1114, %v1687
        %v1689 = vmul.f32 %v1115, %v1687
        %s1690 = sld [smem:[#allocation10 + $0xa]]
        %v1691 = vstv %s1690
        %v1692 = vmul.f32 %v1114, %v1691
        %v1693 = vmul.f32 %v1115, %v1691
        %1696 = vrot.lane.b32.xlu0 %v1692, 127
        %v1697 = vpop.permute.xlu0 %1696
        %1698 = vrot.lane.b32.xlu0 %v1693, 127
        %v1699 = vpop.permute.xlu0 %1698
        %v1702 = vadd.f32 %v1688, %v1697
        %v1703 = vadd.f32 %v1689, %v1699
        %s1704 = sld [smem:[#allocation10 + $0xb]]
        %v1705 = vstv %s1704
        %v1706 = vmul.f32 %v1114, %v1705
        %v1707 = vmul.f32 %v1115, %v1705
        %1710 = vrot.lane.b32.xlu0 %v1706, 126
        %v1711 = vpop.permute.xlu0 %1710
        %1712 = vrot.lane.b32.xlu0 %v1707, 126
        %v1713 = vpop.permute.xlu0 %1712
        %v1716 = vadd.f32 %v1702, %v1711
        %v1717 = vadd.f32 %v1703, %v1713
        %s1718 = sld [smem:[#allocation12 + $0x3]]
        %v1719 = vstv %s1718
        %v1720 = vmul.f32 %v1716, %v1719
        %v1721 = vmul.f32 %v1717, %v1719
        %s1722 = sld [smem:[#allocation13 + $0x3]]
        %v1723 = vstv %s1722
        %v1724 = vadd.f32 %v1720, %v1723
        %v1725 = vadd.f32 %v1721, %v1723
        %v1726 = vmax.f32 %v1724, 0.0
        %v1727 = vmax.f32 %v1725, 0.0
        %s1728 = sld [smem:[#allocation10 + $0x15]]
        %v1729 = vstv %s1728
        %v1730 = vmul.f32 %v1126, %v1729
        %v1731 = vmul.f32 %v1127, %v1729
        %s1732 = sld [smem:[#allocation10 + $0x16]]
        %v1733 = vstv %s1732
        %v1734 = vmul.f32 %v1126, %v1733
        %v1735 = vmul.f32 %v1127, %v1733
        %1738 = vrot.lane.b32.xlu0 %v1734, 127
        %v1739 = vpop.permute.xlu0 %1738
        %1740 = vrot.lane.b32.xlu0 %v1735, 127
        %v1741 = vpop.permute.xlu0 %1740
        %v1744 = vadd.f32 %v1730, %v1739
        %v1745 = vadd.f32 %v1731, %v1741
        %s1746 = sld [smem:[#allocation10 + $0x17]]
        %v1747 = vstv %s1746
        %v1748 = vmul.f32 %v1126, %v1747
        %v1749 = vmul.f32 %v1127, %v1747
        %1752 = vrot.lane.b32.xlu0 %v1748, 126
        %v1753 = vpop.permute.xlu0 %1752
        %1754 = vrot.lane.b32.xlu0 %v1749, 126
        %v1755 = vpop.permute.xlu0 %1754
        %v1758 = vadd.f32 %v1744, %v1753
        %v1759 = vadd.f32 %v1745, %v1755
        %s1760 = sld [smem:[#allocation12 + $0x7]]
        %v1761 = vstv %s1760
        %v1762 = vmul.f32 %v1758, %v1761
        %v1763 = vmul.f32 %v1759, %v1761
        %s1764 = sld [smem:[#allocation13 + $0x7]]
        %v1765 = vstv %s1764
        %v1766 = vadd.f32 %v1762, %v1765
        %v1767 = vadd.f32 %v1763, %v1765
        %v1768 = vmax.f32 %v1766, 0.0
        %v1769 = vmax.f32 %v1767, 0.0
        %v1770 = vmax.f32 %v1726, %v1768
        %v1771 = vmax.f32 %v1727, %v1769
        %s1772 = scalar_lea.vmem %s375, 96 [#allocation15]
        %1773 = vst.msk [vmem:[%s1772] sm:$0xff] %vm1238, %v1770
        %1774 = vst.msk [vmem:[%s1772 + $0x8] sm:$0xff] %vm1238, %v1771
        %s1775 = sld [smem:[#allocation10 + $0x21]]
        %v1776 = vstv %s1775
        %v1777 = vmul.f32 %v1138, %v1776
        %v1778 = vmul.f32 %v1139, %v1776
        %s1779 = sld [smem:[#allocation10 + $0x22]]
        %v1780 = vstv %s1779
        %v1781 = vmul.f32 %v1138, %v1780
        %v1782 = vmul.f32 %v1139, %v1780
        %1785 = vrot.lane.b32.xlu0 %v1781, 127
        %v1786 = vpop.permute.xlu0 %1785
        %1787 = vrot.lane.b32.xlu0 %v1782, 127
        %v1788 = vpop.permute.xlu0 %1787
        %v1791 = vadd.f32 %v1777, %v1786
        %v1792 = vadd.f32 %v1778, %v1788
        %s1793 = sld [smem:[#allocation10 + $0x23]]
        %v1794 = vstv %s1793
        %v1795 = vmul.f32 %v1138, %v1794
        %v1796 = vmul.f32 %v1139, %v1794
        %1799 = vrot.lane.b32.xlu0 %v1795, 126
        %v1800 = vpop.permute.xlu0 %1799
        %1801 = vrot.lane.b32.xlu0 %v1796, 126
        %v1802 = vpop.permute.xlu0 %1801
        %v1805 = vadd.f32 %v1791, %v1800
        %v1806 = vadd.f32 %v1792, %v1802
        %s1807 = sld [smem:[#allocation12 + $0xb]]
        %v1808 = vstv %s1807
        %v1809 = vmul.f32 %v1805, %v1808
        %v1810 = vmul.f32 %v1806, %v1808
        %s1811 = sld [smem:[#allocation13 + $0xb]]
        %v1812 = vstv %s1811
        %v1813 = vadd.f32 %v1809, %v1812
        %v1814 = vadd.f32 %v1810, %v1812
        %v1815 = vmax.f32 %v1813, 0.0
        %v1816 = vmax.f32 %v1814, 0.0
        %s1817 = sld [smem:[#allocation10 + $0x2d]]
        %v1818 = vstv %s1817
        %v1819 = vmul.f32 %v1150, %v1818
        %v1820 = vmul.f32 %v1151, %v1818
        %s1821 = sld [smem:[#allocation10 + $0x2e]]
        %v1822 = vstv %s1821
        %v1823 = vmul.f32 %v1150, %v1822
        %v1824 = vmul.f32 %v1151, %v1822
        %1827 = vrot.lane.b32.xlu0 %v1823, 127
        %v1828 = vpop.permute.xlu0 %1827
        %1829 = vrot.lane.b32.xlu0 %v1824, 127
        %v1830 = vpop.permute.xlu0 %1829
        %v1833 = vadd.f32 %v1819, %v1828
        %v1834 = vadd.f32 %v1820, %v1830
        %s1835 = sld [smem:[#allocation10 + $0x2f]]
        %v1836 = vstv %s1835
        %v1837 = vmul.f32 %v1150, %v1836
        %v1838 = vmul.f32 %v1151, %v1836
        %1841 = vrot.lane.b32.xlu0 %v1837, 126
        %v1842 = vpop.permute.xlu0 %1841
        %1843 = vrot.lane.b32.xlu0 %v1838, 126
        %v1844 = vpop.permute.xlu0 %1843
        %v1847 = vadd.f32 %v1833, %v1842
        %v1848 = vadd.f32 %v1834, %v1844
        %s1849 = sld [smem:[#allocation12 + $0xf]]
        %v1850 = vstv %s1849
        %v1851 = vmul.f32 %v1847, %v1850
        %v1852 = vmul.f32 %v1848, %v1850
        %s1853 = sld [smem:[#allocation13 + $0xf]]
        %v1854 = vstv %s1853
        %v1855 = vadd.f32 %v1851, %v1854
        %v1856 = vadd.f32 %v1852, %v1854
        %v1857 = vmax.f32 %v1855, 0.0
        %v1858 = vmax.f32 %v1856, 0.0
        %v1859 = vmax.f32 %v1815, %v1857
        %v1860 = vmax.f32 %v1816, %v1858
        %s1861 = scalar_lea.vmem %s375, 112 [#allocation15]
        %1862 = vst.msk [vmem:[%s1861] sm:$0xff] %vm1238, %v1859
        %1863 = vst.msk [vmem:[%s1861 + $0x8] sm:$0xff] %vm1238, %v1860
        %s1864 = sand.u32 %s188, 1
        %s1865 = scalar_lea.sflag [#allocation4], %s1864
        %s1866 = sand.u32 %s188, 1
        %s1867 = smul.addr %s1866, 128
        %s1868 = scalar_lea.vmem [#allocation15], %s1867
        // Predicated region
        $region77: #{stem_layer.1} parent=47 // pred_check
          %p1869 = pneg %p198
        $region78: #{stem_layer.1} parent=47 // pred_check_branch
          %1871 = sbr.rel (%p1869) target = $region80
        $region79: #{stem_layer.1} parent=47 // pred_region
          %1873 = vsyncadd %s1865, 0
          %s1874 = smul.addr %s28, 16
          %s1875 = smul.addr %s1874, 8
          %s1876 = scalar_lea.hbm %s7, %s1875
          %s1877 = sshll.u32 %s1868, 4
          %s1878 = int_to_ptr.vmem [resolvable:$true] %s1877
          %s1879 = sshll.u32 %s1876, 4
          %s1880 = int_to_ptr.hbm [resolvable:$true] %s1879
          %1885 = dma.vmem_to_hbm [thread:$0]  %s1878, 2048, %s1880, %s1865, 128, 128, 8
        $region80: #{stem_layer.1} parent=47 // pred_fallthru
          _
      $region48: #{stem_layer.1} parent=5 // pred_fallthru
        _
      %p1886 = scmp.le.s32.totalorder 2, %s23
      // Predicated region
      $region81: #{stem_layer.1} parent=5 // pred_check
        %p1887 = pneg %p1886
      $region82: #{stem_layer.1} parent=5 // pred_check_branch
        %1889 = sbr.rel (%p1887) target = $region84
      $region83: #{stem_layer.1} parent=5 // pred_region
        %s1890 = ssub.s32 %s23, 2
        // Predicated region
        $region85: #{stem_layer.1} parent=83 // pred_check
          %p1891 = pneg %p204
        $region86: #{stem_layer.1} parent=83 // pred_check_branch
          %1893 = sbr.rel (%p1891) target = $region88
        $region87: #{stem_layer.1} parent=83 // pred_region
          %s1894 = sand.u32 %s189, 1
          %s1895 = scalar_lea.sflag [#allocation4], %s1894
          %s1896 = sand.u32 %s189, 1
          %s1897 = smul.addr %s1896, 128
          %s1898 = scalar_lea.vmem [#allocation15], %s1897
          %1900 = dma.done %s1895, 2048
        $region88: #{stem_layer.1} parent=83 // pred_fallthru
          _
      $region84: #{stem_layer.1} parent=5 // pred_fallthru
        _
    $region6: #{stem_layer.1} parent=1 // loop_footer
      %s27 = sadd.s32 1, %s23
    $region7: #{stem_layer.1} parent=1 // loop_footer_branch
      %22 = sbr.rel target = $region3
    $region8: #{stem_layer.1} parent=1 // loop_exit
      _
    %1901 = vsyncpa [#allocation3], 1
    %s1902 = scalar_lea.sflag [#allocation3], 1
    %1903 = vsyncpa %s1902, 1
    %1904 = vsyncpa [#allocation4], 1
    %s1905 = scalar_lea.sflag [#allocation4], 1
    %1906 = vsyncpa %s1905, 1
    %1907 = vsyncpa [#allocation5], 1
    %s1908 = scalar_lea.sflag [#allocation5], 1
    %1909 = vsyncpa %s1908, 1
    %1910 = vsyncpa [#allocation8], 1
    %1911 = vsyncpa [#allocation11], 1
    %1912 = vsyncpa [#allocation14], 1

</llo_original>
